<compile_context>
chip_gen: v7x
topology: tpu7x:2x2x1
jax: 0.10.0
libtpu: 0.0.40
codegen_flags: <defaults>
</compile_context>

<pallas_src>
import functools

import jax
import jax.numpy as jnp
from jax import lax
from jax.experimental import pallas as pl
from jax.experimental.pallas import tpu as pltpu

EPS = 1e-5
NEG_SLOPE = 0.2
_SUBLANE_PAD = 16       # pad channel counts to bf16 sublane tile


# ---------------- in-kernel helpers (traced, run on TPU) --------------------

def _instance_norm(x):
    # x: (C, H*W) f32 -- normalize each channel over the spatial (lane) axis.
    mean = jnp.mean(x, axis=1, keepdims=True)
    ex2 = jnp.mean(x * x, axis=1, keepdims=True)
    # single-pass variance can go slightly negative from cancellation: clamp.
    var = jnp.maximum(ex2 - mean * mean, 0.0)
    return (x - mean) * lax.rsqrt(var + EPS)


def _leaky_relu(x):
    return jnp.maximum(x, NEG_SLOPE * x)


def _conv3x3(w_ref, x32, x16, masks, H, W):
    """3x3 same-padding conv as 9 accumulating per-tap MXU matmuls.

    w_ref : Ref (9, Cout_p, Cin_p) bf16; tap t = kh*3+kw, offsets dh=kh-1, dw=kw-1
    x32   : (Cin_p, H*W) f32   -- source for XLU rolls / VPU border masking
    x16   : (Cin_p, H*W) bf16  -- pre-cast centre tap
    masks : (8, H*W)   f32     -- validity masks for the 8 shifted taps
    """
    HW = H * W
    acc = None
    for t in range(9):
        dh, dw = t // 3 - 1, t % 3 - 1
        if dh == 0 and dw == 0:
            tap = x16
        else:
            s = dh * W + dw                       # want tap[p] = x[p + s]
            m = t if t < 4 else t - 1
            rolled = pltpu.roll(x32, (-s) % HW, 1)           # XLU lane rotation
            tap = (rolled * masks[m:m + 1, :]).astype(jnp.bfloat16)
        part = jnp.dot(w_ref[t], tap, preferred_element_type=jnp.float32)
        acc = part if acc is None else acc + part
    return acc                                     # (Cout_p, H*W) f32


# ---------------- Pallas kernel ----------------------------------------------

def _resblock_kernel(mask_ref, x_ref, w1_ref, w2_ref, *rest,
                     H, W, downsample, Bt):
    if downsample:
        ws_ref, out_ref = rest
    else:
        (out_ref,) = rest

    masks = mask_ref[...]                          # (8, HW) f32, resident block
    for bi in range(Bt):                           # static unroll over batch block
        x32 = x_ref[bi].astype(jnp.float32)        # (Ci_p, HW)
        x16 = x32.astype(jnp.bfloat16)

        # branch: conv3x3 -> IN -> LeakyReLU -> conv3x3 -> IN
        h = _leaky_relu(_instance_norm(_conv3x3(w1_ref, x32, x16, masks, H, W)))
        h = _instance_norm(_conv3x3(w2_ref, h, h.astype(jnp.bfloat16), masks, H, W))

        # skip: IN(Conv1x1(x)) if Cin != Cout else identity
        if downsample:
            skip = _instance_norm(
                jnp.dot(ws_ref[...], x16, preferred_element_type=jnp.float32))
        else:
            skip = x32

        out_ref[bi] = _leaky_relu(skip + h).astype(out_ref.dtype)


# ---------------- wrapper -----------------------------------------------------

def _make_tap_masks(H, W):
    # (8, H*W) f32 border-validity masks for the 8 non-centre 3x3 taps.
    hh = jnp.broadcast_to(jnp.arange(H, dtype=jnp.int32)[:, None], (H, W)).reshape(1, H * W)
    ww = jnp.broadcast_to(jnp.arange(W, dtype=jnp.int32)[None, :], (H, W)).reshape(1, H * W)
    rows = []
    for t in range(9):
        dh, dw = t // 3 - 1, t % 3 - 1
        if dh == 0 and dw == 0:
            continue
        rows.append((hh + dh >= 0) & (hh + dh < H) & (ww + dw >= 0) & (ww + dw < W))
    return jnp.concatenate(rows, axis=0).astype(jnp.float32)


def _pick_batch_block(B, per_elem_bytes, budget_bytes=8 * 2 ** 20):
    # Largest divisor of B that fits the per-step budget while keeping >=2
    # grid steps (when possible) so both v7x TensorCores get work.
    best = 1
    for d in range(1, B + 1):
        if B % d:
            continue
        if d * per_elem_bytes > budget_bytes:
            continue
        if B >= 2 and B // d < 2:
            continue
        best = d
    return best


def resblock_forward(x_nchw, params):
    """ResBlock forward. x_nchw: (B, Cin, H, W) -> (B, Cout, H, W)."""
    B, Ci, H, W = x_nchw.shape
    w1 = params["w1"]                              # (3, 3, Ci, Co) HWIO
    Co = w1.shape[-1]
    HW = H * W
    downsample = Ci != Co

    pad = _SUBLANE_PAD
    Ci_p = -(-Ci // pad) * pad
    Co_p = -(-Co // pad) * pad

    # NCHW -> (B, C, H*W): pure reshape; input DMA'd in its native dtype.
    x = x_nchw.reshape(B, Ci, HW)
    if Ci_p != Ci:
        x = jnp.pad(x, ((0, 0), (0, Ci_p - Ci), (0, 0)))

    # Weights -> per-tap matmul form (9, Cout_p, Cin_p), bf16 for the MXU.
    # Conv biases b1/b2/bs are intentionally dropped: each conv feeds an
    # affine-less InstanceNorm, which cancels per-channel constants exactly.
    w1_t = jnp.transpose(w1, (0, 1, 3, 2)).reshape(9, Co, Ci)
    w1_t = jnp.pad(w1_t, ((0, 0), (0, Co_p - Co), (0, Ci_p - Ci))).astype(jnp.bfloat16)
    w2_t = jnp.transpose(params["w2"], (0, 1, 3, 2)).reshape(9, Co, Co)
    w2_t = jnp.pad(w2_t, ((0, 0), (0, Co_p - Co), (0, Co_p - Co))).astype(jnp.bfloat16)

    masks = _make_tap_masks(H, W)                  # hoisted out of the kernel

    per_elem_bytes = 4 * HW * (Ci_p + 6 * Co_p)    # rough f32 working set / element
    batch_block = _pick_batch_block(B, per_elem_bytes)
    grid_b = B // batch_block

    in_specs = [
        pl.BlockSpec((8, HW), lambda b: (0, 0)),                      # masks (resident)
        pl.BlockSpec((batch_block, Ci_p, HW), lambda b: (b, 0, 0)),   # x
        pl.BlockSpec((9, Co_p, Ci_p), lambda b: (0, 0, 0)),           # w1 (resident)
        pl.BlockSpec((9, Co_p, Co_p), lambda b: (0, 0, 0)),           # w2 (resident)
    ]
    args = [masks, x, w1_t, w2_t]
    if downsample:
        ws_t = jnp.pad(params["ws"].T,
                       ((0, Co_p - Co), (0, Ci_p - Ci))).astype(jnp.bfloat16)
        in_specs.append(pl.BlockSpec((Co_p, Ci_p), lambda b: (0, 0)))
        args.append(ws_t)

    # 64 MiB cap keeps us inside v7x's per-TC VMEM; on v5e/v6e this could be
    # raised toward ~100 MiB for very large C*HW instead of spatial tiling.
    vmem_limit = int(min(64 * 2 ** 20,
                         max(32 * 2 ** 20, 4 * per_elem_bytes * batch_block)))

    # TODO(synk): for very large H*W where even the scratch-free whole-image
    # slab exceeds VMEM, add an H-tiled grid axis with 1-row halos.
    kernel = functools.partial(_resblock_kernel, H=H, W=W,
                               downsample=downsample, Bt=batch_block)
    out = pl.pallas_call(
        kernel,
        out_shape=jax.ShapeDtypeStruct((B, Co_p, HW), x_nchw.dtype),
        grid_spec=pltpu.PrefetchScalarGridSpec(
            num_scalar_prefetch=0,
            grid=(grid_b,),
            in_specs=in_specs,
            out_specs=pl.BlockSpec((batch_block, Co_p, HW), lambda b: (b, 0, 0)),
        ),
        compiler_params=pltpu.CompilerParams(
            dimension_semantics=("parallel",),     # batch shards across TCs (v7x)
            vmem_limit_bytes=vmem_limit,
        ),
    )(*args)
    return out[:, :Co, :].reshape(B, Co, H, W)


# ---------------- pure-JAX reference (for sanity check) ----------------------

def _ref_instance_norm(x_nhwc):
    mean = jnp.mean(x_nhwc, axis=(1, 2), keepdims=True)
    var = jnp.mean((x_nhwc - mean) ** 2, axis=(1, 2), keepdims=True)
    return (x_nhwc - mean) * lax.rsqrt(var + EPS)


def resblock_reference(x_nchw, params):
    x = jnp.transpose(x_nchw, (0, 2, 3, 1)).astype(jnp.float32)  # NHWC
    Ci = x.shape[-1]
    Co = params["w1"].shape[-1]
    dn = ("NHWC", "HWIO", "NHWC")

    h = lax.conv_general_dilated(x, params["w1"], (1, 1), "SAME",
                                 dimension_numbers=dn) + params["b1"]
    h = _ref_instance_norm(h)
    h = jnp.maximum(h, NEG_SLOPE * h)
    h = lax.conv_general_dilated(h, params["w2"], (1, 1), "SAME",
                                 dimension_numbers=dn) + params["b2"]
    h = _ref_instance_norm(h)

    if Ci != Co:
        ws = params["ws"].reshape(1, 1, Ci, Co)
        skip = lax.conv_general_dilated(x, ws, (1, 1), "SAME",
                                        dimension_numbers=dn) + params["bs"]
        skip = _ref_instance_norm(skip)
    else:
        skip = x

    out = jnp.maximum(skip + h, NEG_SLOPE * (skip + h))
    return jnp.transpose(out, (0, 3, 1, 2))


# ---------------- main --------------------------------------------------------

def init_params(key, in_channels, out_channels):
    ks = jax.random.split(key, 6)

    def u(k, shape, fan_in):
        bound = 1.0 / jnp.sqrt(fan_in)
        return jax.random.uniform(k, shape, jnp.float32, -bound, bound)

    params = {
        "w1": u(ks[0], (3, 3, in_channels, out_channels), 9 * in_channels),
        "b1": u(ks[1], (out_channels,), 9 * in_channels),
        "w2": u(ks[2], (3, 3, out_channels, out_channels), 9 * out_channels),
        "b2": u(ks[3], (out_channels,), 9 * out_channels),
    }
    if in_channels != out_channels:
        params["ws"] = u(ks[4], (in_channels, out_channels), in_channels)
        params["bs"] = u(ks[5], (out_channels,), in_channels)
    return params


if __name__ == "__main__":
    key = jax.random.PRNGKey(0)
    kx, kp, kx2, kp2 = jax.random.split(key, 4)

    # Downsample path (Cin != Cout); batch_block = 1, grid = 2.
    B, Cin, Cout, H, W = 2, 4, 8, 16, 16
    x = jax.random.normal(kx, (B, Cin, H, W), jnp.float32)
    params = init_params(kp, Cin, Cout)
    out = jax.block_until_ready(resblock_forward(x, params))
    assert out.shape == (B, Cout, H, W), out.shape
    ref = jax.block_until_ready(resblock_reference(x, params))
    # bf16 MXU operands -> loosened tolerance vs the f32 reference.
    assert jnp.allclose(out, ref, atol=1e-1, rtol=5e-2), float(
        jnp.max(jnp.abs(out - ref)))

    # Identity-skip path (Cin == Cout); B=4 exercises batch_block = 2.
    B2 = 4
    x2 = jax.random.normal(kx2, (B2, Cout, H, W), jnp.float32)
    params2 = init_params(kp2, Cout, Cout)
    out2 = jax.block_until_ready(resblock_forward(x2, params2))
    ref2 = jax.block_until_ready(resblock_reference(x2, params2))
    assert jnp.allclose(out2, ref2, atol=1e-1, rtol=5e-2), float(
        jnp.max(jnp.abs(out2 - ref2)))

    print("KERNEL_OK")
</pallas_src>

<mosaic_0001>
module attributes {stable_mosaic.version = 11 : i64} {
  func.func @_resblock_kernel(%arg0: i32, %arg1: memref<8x256xf32, #tpu.memory_space<vmem>>, %arg2: memref<1x16x256xf32, #tpu.memory_space<vmem>>, %arg3: memref<9x16x16xbf16, #tpu.memory_space<vmem>>, %arg4: memref<9x16x16xbf16, #tpu.memory_space<vmem>>, %arg5: memref<16x16xbf16, #tpu.memory_space<vmem>>, %arg6: memref<1x16x256xf32, #tpu.memory_space<vmem>>) attributes {dimension_semantics = [#tpu.dimension_semantics<parallel>], iteration_bounds = array<i64: 2>, scalar_prefetch = 0 : i64, scratch_operands = 0 : i64, tpu.core_type = #tpu.core_type<tc>, window_params = [{pipeline_mode = #tpu.pipeline_mode<synchronous>, transform_indices = @transform_0, window_bounds = array<i64: 8, 256>}, {transform_indices = @transform_1, window_bounds = array<i64: 1, 16, 256>}, {pipeline_mode = #tpu.pipeline_mode<synchronous>, transform_indices = @transform_2, window_bounds = array<i64: 9, 16, 16>}, {pipeline_mode = #tpu.pipeline_mode<synchronous>, transform_indices = @transform_3, window_bounds = array<i64: 9, 16, 16>}, {pipeline_mode = #tpu.pipeline_mode<synchronous>, transform_indices = @transform_4, window_bounds = array<i64: 16, 16>}, {transform_indices = @transform_5, window_bounds = array<i64: 1, 16, 256>}]} {
    %c0 = arith.constant 0 : index
    %c0_0 = arith.constant 0 : index
    %0 = vector.load %arg1[%c0, %c0_0] : memref<8x256xf32, #tpu.memory_space<vmem>>, vector<8x256xf32>
    %c0_1 = arith.constant 0 : index
    %c0_2 = arith.constant 0 : index
    %c0_3 = arith.constant 0 : index
    %1 = vector.load %arg2[%c0_1, %c0_2, %c0_3] : memref<1x16x256xf32, #tpu.memory_space<vmem>>, vector<1x16x256xf32>
    %2 = vector.shape_cast %1 : vector<1x16x256xf32> to vector<16x256xf32>
    %3 = arith.truncf %2 : vector<16x256xf32> to vector<16x256xbf16>
    %c17_i32 = arith.constant 17 : i32
    %4 = tpu.dynamic_rotate %2 by %c17_i32 dim 1 : vector<16x256xf32>, i32 -> vector<16x256xf32>
    %5 = vector.extract_strided_slice %0 {offsets = [0, 0], sizes = [1, 256], strides = [1, 1]} : vector<8x256xf32> to vector<1x256xf32>
    %6 = vector.broadcast %5 : vector<1x256xf32> to vector<16x256xf32>
    %7 = arith.mulf %4, %6 : vector<16x256xf32>
    %8 = arith.truncf %7 : vector<16x256xf32> to vector<16x256xbf16>
    %c0_4 = arith.constant 0 : index
    %c0_5 = arith.constant 0 : index
    %c0_6 = arith.constant 0 : index
    %9 = vector.load %arg3[%c0_4, %c0_5, %c0_6] : memref<9x16x16xbf16, #tpu.memory_space<vmem>>, vector<1x16x16xbf16>
    %10 = vector.shape_cast %9 : vector<1x16x16xbf16> to vector<16x16xbf16>
    %cst = arith.constant dense<0.000000e+00> : vector<16x256xf32>
    %11 = tpu.matmul %10, %8, %cst {dimension_numbers = #tpu.dot_dimension_numbers<[1], [0], [0], [1], [0, 0, 1, 1], [], []>} : vector<16x16xbf16>, vector<16x256xbf16>, vector<16x256xf32> -> vector<16x256xf32>
    %c16_i32 = arith.constant 16 : i32
    %12 = tpu.dynamic_rotate %2 by %c16_i32 dim 1 : vector<16x256xf32>, i32 -> vector<16x256xf32>
    %13 = vector.extract_strided_slice %0 {offsets = [1, 0], sizes = [1, 256], strides = [1, 1]} : vector<8x256xf32> to vector<1x256xf32>
    %14 = vector.broadcast %13 : vector<1x256xf32> to vector<16x256xf32>
    %15 = arith.mulf %12, %14 : vector<16x256xf32>
    %16 = arith.truncf %15 : vector<16x256xf32> to vector<16x256xbf16>
    %c1 = arith.constant 1 : index
    %c0_7 = arith.constant 0 : index
    %c0_8 = arith.constant 0 : index
    %17 = vector.load %arg3[%c1, %c0_7, %c0_8] : memref<9x16x16xbf16, #tpu.memory_space<vmem>>, vector<1x16x16xbf16>
    %18 = vector.shape_cast %17 : vector<1x16x16xbf16> to vector<16x16xbf16>
    %cst_9 = arith.constant dense<0.000000e+00> : vector<16x256xf32>
    %19 = tpu.matmul %18, %16, %cst_9 {dimension_numbers = #tpu.dot_dimension_numbers<[1], [0], [0], [1], [0, 0, 1, 1], [], []>} : vector<16x16xbf16>, vector<16x256xbf16>, vector<16x256xf32> -> vector<16x256xf32>
    %20 = arith.addf %11, %19 : vector<16x256xf32>
    %c15_i32 = arith.constant 15 : i32
    %21 = tpu.dynamic_rotate %2 by %c15_i32 dim 1 : vector<16x256xf32>, i32 -> vector<16x256xf32>
    %22 = vector.extract_strided_slice %0 {offsets = [2, 0], sizes = [1, 256], strides = [1, 1]} : vector<8x256xf32> to vector<1x256xf32>
    %23 = vector.broadcast %22 : vector<1x256xf32> to vector<16x256xf32>
    %24 = arith.mulf %21, %23 : vector<16x256xf32>
    %25 = arith.truncf %24 : vector<16x256xf32> to vector<16x256xbf16>
    %c2 = arith.constant 2 : index
    %c0_10 = arith.constant 0 : index
    %c0_11 = arith.constant 0 : index
    %26 = vector.load %arg3[%c2, %c0_10, %c0_11] : memref<9x16x16xbf16, #tpu.memory_space<vmem>>, vector<1x16x16xbf16>
    %27 = vector.shape_cast %26 : vector<1x16x16xbf16> to vector<16x16xbf16>
    %cst_12 = arith.constant dense<0.000000e+00> : vector<16x256xf32>
    %28 = tpu.matmul %27, %25, %cst_12 {dimension_numbers = #tpu.dot_dimension_numbers<[1], [0], [0], [1], [0, 0, 1, 1], [], []>} : vector<16x16xbf16>, vector<16x256xbf16>, vector<16x256xf32> -> vector<16x256xf32>
    %29 = arith.addf %20, %28 : vector<16x256xf32>
    %c1_i32 = arith.constant 1 : i32
    %30 = tpu.dynamic_rotate %2 by %c1_i32 dim 1 : vector<16x256xf32>, i32 -> vector<16x256xf32>
    %31 = vector.extract_strided_slice %0 {offsets = [3, 0], sizes = [1, 256], strides = [1, 1]} : vector<8x256xf32> to vector<1x256xf32>
    %32 = vector.broadcast %31 : vector<1x256xf32> to vector<16x256xf32>
    %33 = arith.mulf %30, %32 : vector<16x256xf32>
    %34 = arith.truncf %33 : vector<16x256xf32> to vector<16x256xbf16>
    %c3 = arith.constant 3 : index
    %c0_13 = arith.constant 0 : index
    %c0_14 = arith.constant 0 : index
    %35 = vector.load %arg3[%c3, %c0_13, %c0_14] : memref<9x16x16xbf16, #tpu.memory_space<vmem>>, vector<1x16x16xbf16>
    %36 = vector.shape_cast %35 : vector<1x16x16xbf16> to vector<16x16xbf16>
    %cst_15 = arith.constant dense<0.000000e+00> : vector<16x256xf32>
    %37 = tpu.matmul %36, %34, %cst_15 {dimension_numbers = #tpu.dot_dimension_numbers<[1], [0], [0], [1], [0, 0, 1, 1], [], []>} : vector<16x16xbf16>, vector<16x256xbf16>, vector<16x256xf32> -> vector<16x256xf32>
    %38 = arith.addf %29, %37 : vector<16x256xf32>
    %c4 = arith.constant 4 : index
    %c0_16 = arith.constant 0 : index
    %c0_17 = arith.constant 0 : index
    %39 = vector.load %arg3[%c4, %c0_16, %c0_17] : memref<9x16x16xbf16, #tpu.memory_space<vmem>>, vector<1x16x16xbf16>
    %40 = vector.shape_cast %39 : vector<1x16x16xbf16> to vector<16x16xbf16>
    %cst_18 = arith.constant dense<0.000000e+00> : vector<16x256xf32>
    %41 = tpu.matmul %40, %3, %cst_18 {dimension_numbers = #tpu.dot_dimension_numbers<[1], [0], [0], [1], [0, 0, 1, 1], [], []>} : vector<16x16xbf16>, vector<16x256xbf16>, vector<16x256xf32> -> vector<16x256xf32>
    %42 = arith.addf %38, %41 : vector<16x256xf32>
    %c255_i32 = arith.constant 255 : i32
    %43 = tpu.dynamic_rotate %2 by %c255_i32 dim 1 : vector<16x256xf32>, i32 -> vector<16x256xf32>
    %44 = vector.extract_strided_slice %0 {offsets = [4, 0], sizes = [1, 256], strides = [1, 1]} : vector<8x256xf32> to vector<1x256xf32>
    %45 = vector.broadcast %44 : vector<1x256xf32> to vector<16x256xf32>
    %46 = arith.mulf %43, %45 : vector<16x256xf32>
    %47 = arith.truncf %46 : vector<16x256xf32> to vector<16x256xbf16>
    %c5 = arith.constant 5 : index
    %c0_19 = arith.constant 0 : index
    %c0_20 = arith.constant 0 : index
    %48 = vector.load %arg3[%c5, %c0_19, %c0_20] : memref<9x16x16xbf16, #tpu.memory_space<vmem>>, vector<1x16x16xbf16>
    %49 = vector.shape_cast %48 : vector<1x16x16xbf16> to vector<16x16xbf16>
    %cst_21 = arith.constant dense<0.000000e+00> : vector<16x256xf32>
    %50 = tpu.matmul %49, %47, %cst_21 {dimension_numbers = #tpu.dot_dimension_numbers<[1], [0], [0], [1], [0, 0, 1, 1], [], []>} : vector<16x16xbf16>, vector<16x256xbf16>, vector<16x256xf32> -> vector<16x256xf32>
    %51 = arith.addf %42, %50 : vector<16x256xf32>
    %c241_i32 = arith.constant 241 : i32
    %52 = tpu.dynamic_rotate %2 by %c241_i32 dim 1 : vector<16x256xf32>, i32 -> vector<16x256xf32>
    %53 = vector.extract_strided_slice %0 {offsets = [5, 0], sizes = [1, 256], strides = [1, 1]} : vector<8x256xf32> to vector<1x256xf32>
    %54 = vector.broadcast %53 : vector<1x256xf32> to vector<16x256xf32>
    %55 = arith.mulf %52, %54 : vector<16x256xf32>
    %56 = arith.truncf %55 : vector<16x256xf32> to vector<16x256xbf16>
    %c6 = arith.constant 6 : index
    %c0_22 = arith.constant 0 : index
    %c0_23 = arith.constant 0 : index
    %57 = vector.load %arg3[%c6, %c0_22, %c0_23] : memref<9x16x16xbf16, #tpu.memory_space<vmem>>, vector<1x16x16xbf16>
    %58 = vector.shape_cast %57 : vector<1x16x16xbf16> to vector<16x16xbf16>
    %cst_24 = arith.constant dense<0.000000e+00> : vector<16x256xf32>
    %59 = tpu.matmul %58, %56, %cst_24 {dimension_numbers = #tpu.dot_dimension_numbers<[1], [0], [0], [1], [0, 0, 1, 1], [], []>} : vector<16x16xbf16>, vector<16x256xbf16>, vector<16x256xf32> -> vector<16x256xf32>
    %60 = arith.addf %51, %59 : vector<16x256xf32>
    %c240_i32 = arith.constant 240 : i32
    %61 = tpu.dynamic_rotate %2 by %c240_i32 dim 1 : vector<16x256xf32>, i32 -> vector<16x256xf32>
    %62 = vector.extract_strided_slice %0 {offsets = [6, 0], sizes = [1, 256], strides = [1, 1]} : vector<8x256xf32> to vector<1x256xf32>
    %63 = vector.broadcast %62 : vector<1x256xf32> to vector<16x256xf32>
    %64 = arith.mulf %61, %63 : vector<16x256xf32>
    %65 = arith.truncf %64 : vector<16x256xf32> to vector<16x256xbf16>
    %c7 = arith.constant 7 : index
    %c0_25 = arith.constant 0 : index
    %c0_26 = arith.constant 0 : index
    %66 = vector.load %arg3[%c7, %c0_25, %c0_26] : memref<9x16x16xbf16, #tpu.memory_space<vmem>>, vector<1x16x16xbf16>
    %67 = vector.shape_cast %66 : vector<1x16x16xbf16> to vector<16x16xbf16>
    %cst_27 = arith.constant dense<0.000000e+00> : vector<16x256xf32>
    %68 = tpu.matmul %67, %65, %cst_27 {dimension_numbers = #tpu.dot_dimension_numbers<[1], [0], [0], [1], [0, 0, 1, 1], [], []>} : vector<16x16xbf16>, vector<16x256xbf16>, vector<16x256xf32> -> vector<16x256xf32>
    %69 = arith.addf %60, %68 : vector<16x256xf32>
    %c239_i32 = arith.constant 239 : i32
    %70 = tpu.dynamic_rotate %2 by %c239_i32 dim 1 : vector<16x256xf32>, i32 -> vector<16x256xf32>
    %71 = vector.extract_strided_slice %0 {offsets = [7, 0], sizes = [1, 256], strides = [1, 1]} : vector<8x256xf32> to vector<1x256xf32>
    %72 = vector.broadcast %71 : vector<1x256xf32> to vector<16x256xf32>
    %73 = arith.mulf %70, %72 : vector<16x256xf32>
    %74 = arith.truncf %73 : vector<16x256xf32> to vector<16x256xbf16>
    %c8 = arith.constant 8 : index
    %c0_28 = arith.constant 0 : index
    %c0_29 = arith.constant 0 : index
    %75 = vector.load %arg3[%c8, %c0_28, %c0_29] : memref<9x16x16xbf16, #tpu.memory_space<vmem>>, vector<1x16x16xbf16>
    %76 = vector.shape_cast %75 : vector<1x16x16xbf16> to vector<16x16xbf16>
    %cst_30 = arith.constant dense<0.000000e+00> : vector<16x256xf32>
    %77 = tpu.matmul %76, %74, %cst_30 {dimension_numbers = #tpu.dot_dimension_numbers<[1], [0], [0], [1], [0, 0, 1, 1], [], []>} : vector<16x16xbf16>, vector<16x256xbf16>, vector<16x256xf32> -> vector<16x256xf32>
    %78 = arith.addf %69, %77 : vector<16x256xf32>
    %cst_31 = arith.constant dense<0.000000e+00> : vector<16xf32>
    %79 = vector.multi_reduction <add>, %78, %cst_31 [1] : vector<16x256xf32> to vector<16xf32>
    %80 = vector.shape_cast %79 : vector<16xf32> to vector<16x1xf32>
    %cst_32 = arith.constant 2.560000e+02 : f32
    %81 = vector.broadcast %cst_32 : f32 to vector<16x1xf32>
    %82 = arith.divf %80, %81 : vector<16x1xf32>
    %83 = arith.mulf %78, %78 : vector<16x256xf32>
    %cst_33 = arith.constant dense<0.000000e+00> : vector<16xf32>
    %84 = vector.multi_reduction <add>, %83, %cst_33 [1] : vector<16x256xf32> to vector<16xf32>
    %85 = vector.shape_cast %84 : vector<16xf32> to vector<16x1xf32>
    %cst_34 = arith.constant 2.560000e+02 : f32
    %86 = vector.broadcast %cst_34 : f32 to vector<16x1xf32>
    %87 = arith.divf %85, %86 : vector<16x1xf32>
    %88 = arith.mulf %82, %82 : vector<16x1xf32>
    %89 = arith.subf %87, %88 : vector<16x1xf32>
    %cst_35 = arith.constant 0.000000e+00 : f32
    %90 = vector.broadcast %cst_35 : f32 to vector<16x1xf32>
    %91 = arith.maximumf %89, %90 : vector<16x1xf32>
    %92 = vector.broadcast %82 : vector<16x1xf32> to vector<16x256xf32>
    %93 = arith.subf %78, %92 : vector<16x256xf32>
    %cst_36 = arith.constant 9.99999974E-6 : f32
    %94 = vector.broadcast %cst_36 : f32 to vector<16x1xf32>
    %95 = arith.addf %91, %94 : vector<16x1xf32>
    %96 = math.rsqrt %95 : vector<16x1xf32>
    %97 = vector.broadcast %96 : vector<16x1xf32> to vector<16x256xf32>
    %98 = arith.mulf %93, %97 : vector<16x256xf32>
    %cst_37 = arith.constant 2.000000e-01 : f32
    %99 = vector.broadcast %cst_37 : f32 to vector<16x256xf32>
    %100 = arith.mulf %99, %98 : vector<16x256xf32>
    %101 = arith.maximumf %98, %100 : vector<16x256xf32>
    %102 = arith.truncf %101 : vector<16x256xf32> to vector<16x256xbf16>
    %c17_i32_38 = arith.constant 17 : i32
    %103 = tpu.dynamic_rotate %101 by %c17_i32_38 dim 1 : vector<16x256xf32>, i32 -> vector<16x256xf32>
    %104 = vector.extract_strided_slice %0 {offsets = [0, 0], sizes = [1, 256], strides = [1, 1]} : vector<8x256xf32> to vector<1x256xf32>
    %105 = vector.broadcast %104 : vector<1x256xf32> to vector<16x256xf32>
    %106 = arith.mulf %103, %105 : vector<16x256xf32>
    %107 = arith.truncf %106 : vector<16x256xf32> to vector<16x256xbf16>
    %c0_39 = arith.constant 0 : index
    %c0_40 = arith.constant 0 : index
    %c0_41 = arith.constant 0 : index
    %108 = vector.load %arg4[%c0_39, %c0_40, %c0_41] : memref<9x16x16xbf16, #tpu.memory_space<vmem>>, vector<1x16x16xbf16>
    %109 = vector.shape_cast %108 : vector<1x16x16xbf16> to vector<16x16xbf16>
    %cst_42 = arith.constant dense<0.000000e+00> : vector<16x256xf32>
    %110 = tpu.matmul %109, %107, %cst_42 {dimension_numbers = #tpu.dot_dimension_numbers<[1], [0], [0], [1], [0, 0, 1, 1], [], []>} : vector<16x16xbf16>, vector<16x256xbf16>, vector<16x256xf32> -> vector<16x256xf32>
    %c16_i32_43 = arith.constant 16 : i32
    %111 = tpu.dynamic_rotate %101 by %c16_i32_43 dim 1 : vector<16x256xf32>, i32 -> vector<16x256xf32>
    %112 = vector.extract_strided_slice %0 {offsets = [1, 0], sizes = [1, 256], strides = [1, 1]} : vector<8x256xf32> to vector<1x256xf32>
    %113 = vector.broadcast %112 : vector<1x256xf32> to vector<16x256xf32>
    %114 = arith.mulf %111, %113 : vector<16x256xf32>
    %115 = arith.truncf %114 : vector<16x256xf32> to vector<16x256xbf16>
    %c1_44 = arith.constant 1 : index
    %c0_45 = arith.constant 0 : index
    %c0_46 = arith.constant 0 : index
    %116 = vector.load %arg4[%c1_44, %c0_45, %c0_46] : memref<9x16x16xbf16, #tpu.memory_space<vmem>>, vector<1x16x16xbf16>
    %117 = vector.shape_cast %116 : vector<1x16x16xbf16> to vector<16x16xbf16>
    %cst_47 = arith.constant dense<0.000000e+00> : vector<16x256xf32>
    %118 = tpu.matmul %117, %115, %cst_47 {dimension_numbers = #tpu.dot_dimension_numbers<[1], [0], [0], [1], [0, 0, 1, 1], [], []>} : vector<16x16xbf16>, vector<16x256xbf16>, vector<16x256xf32> -> vector<16x256xf32>
    %119 = arith.addf %110, %118 : vector<16x256xf32>
    %c15_i32_48 = arith.constant 15 : i32
    %120 = tpu.dynamic_rotate %101 by %c15_i32_48 dim 1 : vector<16x256xf32>, i32 -> vector<16x256xf32>
    %121 = vector.extract_strided_slice %0 {offsets = [2, 0], sizes = [1, 256], strides = [1, 1]} : vector<8x256xf32> to vector<1x256xf32>
    %122 = vector.broadcast %121 : vector<1x256xf32> to vector<16x256xf32>
    %123 = arith.mulf %120, %122 : vector<16x256xf32>
    %124 = arith.truncf %123 : vector<16x256xf32> to vector<16x256xbf16>
    %c2_49 = arith.constant 2 : index
    %c0_50 = arith.constant 0 : index
    %c0_51 = arith.constant 0 : index
    %125 = vector.load %arg4[%c2_49, %c0_50, %c0_51] : memref<9x16x16xbf16, #tpu.memory_space<vmem>>, vector<1x16x16xbf16>
    %126 = vector.shape_cast %125 : vector<1x16x16xbf16> to vector<16x16xbf16>
    %cst_52 = arith.constant dense<0.000000e+00> : vector<16x256xf32>
    %127 = tpu.matmul %126, %124, %cst_52 {dimension_numbers = #tpu.dot_dimension_numbers<[1], [0], [0], [1], [0, 0, 1, 1], [], []>} : vector<16x16xbf16>, vector<16x256xbf16>, vector<16x256xf32> -> vector<16x256xf32>
    %128 = arith.addf %119, %127 : vector<16x256xf32>
    %c1_i32_53 = arith.constant 1 : i32
    %129 = tpu.dynamic_rotate %101 by %c1_i32_53 dim 1 : vector<16x256xf32>, i32 -> vector<16x256xf32>
    %130 = vector.extract_strided_slice %0 {offsets = [3, 0], sizes = [1, 256], strides = [1, 1]} : vector<8x256xf32> to vector<1x256xf32>
    %131 = vector.broadcast %130 : vector<1x256xf32> to vector<16x256xf32>
    %132 = arith.mulf %129, %131 : vector<16x256xf32>
    %133 = arith.truncf %132 : vector<16x256xf32> to vector<16x256xbf16>
    %c3_54 = arith.constant 3 : index
    %c0_55 = arith.constant 0 : index
    %c0_56 = arith.constant 0 : index
    %134 = vector.load %arg4[%c3_54, %c0_55, %c0_56] : memref<9x16x16xbf16, #tpu.memory_space<vmem>>, vector<1x16x16xbf16>
    %135 = vector.shape_cast %134 : vector<1x16x16xbf16> to vector<16x16xbf16>
    %cst_57 = arith.constant dense<0.000000e+00> : vector<16x256xf32>
    %136 = tpu.matmul %135, %133, %cst_57 {dimension_numbers = #tpu.dot_dimension_numbers<[1], [0], [0], [1], [0, 0, 1, 1], [], []>} : vector<16x16xbf16>, vector<16x256xbf16>, vector<16x256xf32> -> vector<16x256xf32>
    %137 = arith.addf %128, %136 : vector<16x256xf32>
    %c4_58 = arith.constant 4 : index
    %c0_59 = arith.constant 0 : index
    %c0_60 = arith.constant 0 : index
    %138 = vector.load %arg4[%c4_58, %c0_59, %c0_60] : memref<9x16x16xbf16, #tpu.memory_space<vmem>>, vector<1x16x16xbf16>
    %139 = vector.shape_cast %138 : vector<1x16x16xbf16> to vector<16x16xbf16>
    %cst_61 = arith.constant dense<0.000000e+00> : vector<16x256xf32>
    %140 = tpu.matmul %139, %102, %cst_61 {dimension_numbers = #tpu.dot_dimension_numbers<[1], [0], [0], [1], [0, 0, 1, 1], [], []>} : vector<16x16xbf16>, vector<16x256xbf16>, vector<16x256xf32> -> vector<16x256xf32>
    %141 = arith.addf %137, %140 : vector<16x256xf32>
    %c255_i32_62 = arith.constant 255 : i32
    %142 = tpu.dynamic_rotate %101 by %c255_i32_62 dim 1 : vector<16x256xf32>, i32 -> vector<16x256xf32>
    %143 = vector.extract_strided_slice %0 {offsets = [4, 0], sizes = [1, 256], strides = [1, 1]} : vector<8x256xf32> to vector<1x256xf32>
    %144 = vector.broadcast %143 : vector<1x256xf32> to vector<16x256xf32>
    %145 = arith.mulf %142, %144 : vector<16x256xf32>
    %146 = arith.truncf %145 : vector<16x256xf32> to vector<16x256xbf16>
    %c5_63 = arith.constant 5 : index
    %c0_64 = arith.constant 0 : index
    %c0_65 = arith.constant 0 : index
    %147 = vector.load %arg4[%c5_63, %c0_64, %c0_65] : memref<9x16x16xbf16, #tpu.memory_space<vmem>>, vector<1x16x16xbf16>
    %148 = vector.shape_cast %147 : vector<1x16x16xbf16> to vector<16x16xbf16>
    %cst_66 = arith.constant dense<0.000000e+00> : vector<16x256xf32>
    %149 = tpu.matmul %148, %146, %cst_66 {dimension_numbers = #tpu.dot_dimension_numbers<[1], [0], [0], [1], [0, 0, 1, 1], [], []>} : vector<16x16xbf16>, vector<16x256xbf16>, vector<16x256xf32> -> vector<16x256xf32>
    %150 = arith.addf %141, %149 : vector<16x256xf32>
    %c241_i32_67 = arith.constant 241 : i32
    %151 = tpu.dynamic_rotate %101 by %c241_i32_67 dim 1 : vector<16x256xf32>, i32 -> vector<16x256xf32>
    %152 = vector.extract_strided_slice %0 {offsets = [5, 0], sizes = [1, 256], strides = [1, 1]} : vector<8x256xf32> to vector<1x256xf32>
    %153 = vector.broadcast %152 : vector<1x256xf32> to vector<16x256xf32>
    %154 = arith.mulf %151, %153 : vector<16x256xf32>
    %155 = arith.truncf %154 : vector<16x256xf32> to vector<16x256xbf16>
    %c6_68 = arith.constant 6 : index
    %c0_69 = arith.constant 0 : index
    %c0_70 = arith.constant 0 : index
    %156 = vector.load %arg4[%c6_68, %c0_69, %c0_70] : memref<9x16x16xbf16, #tpu.memory_space<vmem>>, vector<1x16x16xbf16>
    %157 = vector.shape_cast %156 : vector<1x16x16xbf16> to vector<16x16xbf16>
    %cst_71 = arith.constant dense<0.000000e+00> : vector<16x256xf32>
    %158 = tpu.matmul %157, %155, %cst_71 {dimension_numbers = #tpu.dot_dimension_numbers<[1], [0], [0], [1], [0, 0, 1, 1], [], []>} : vector<16x16xbf16>, vector<16x256xbf16>, vector<16x256xf32> -> vector<16x256xf32>
    %159 = arith.addf %150, %158 : vector<16x256xf32>
    %c240_i32_72 = arith.constant 240 : i32
    %160 = tpu.dynamic_rotate %101 by %c240_i32_72 dim 1 : vector<16x256xf32>, i32 -> vector<16x256xf32>
    %161 = vector.extract_strided_slice %0 {offsets = [6, 0], sizes = [1, 256], strides = [1, 1]} : vector<8x256xf32> to vector<1x256xf32>
    %162 = vector.broadcast %161 : vector<1x256xf32> to vector<16x256xf32>
    %163 = arith.mulf %160, %162 : vector<16x256xf32>
    %164 = arith.truncf %163 : vector<16x256xf32> to vector<16x256xbf16>
    %c7_73 = arith.constant 7 : index
    %c0_74 = arith.constant 0 : index
    %c0_75 = arith.constant 0 : index
    %165 = vector.load %arg4[%c7_73, %c0_74, %c0_75] : memref<9x16x16xbf16, #tpu.memory_space<vmem>>, vector<1x16x16xbf16>
    %166 = vector.shape_cast %165 : vector<1x16x16xbf16> to vector<16x16xbf16>
    %cst_76 = arith.constant dense<0.000000e+00> : vector<16x256xf32>
    %167 = tpu.matmul %166, %164, %cst_76 {dimension_numbers = #tpu.dot_dimension_numbers<[1], [0], [0], [1], [0, 0, 1, 1], [], []>} : vector<16x16xbf16>, vector<16x256xbf16>, vector<16x256xf32> -> vector<16x256xf32>
    %168 = arith.addf %159, %167 : vector<16x256xf32>
    %c239_i32_77 = arith.constant 239 : i32
    %169 = tpu.dynamic_rotate %101 by %c239_i32_77 dim 1 : vector<16x256xf32>, i32 -> vector<16x256xf32>
    %170 = vector.extract_strided_slice %0 {offsets = [7, 0], sizes = [1, 256], strides = [1, 1]} : vector<8x256xf32> to vector<1x256xf32>
    %171 = vector.broadcast %170 : vector<1x256xf32> to vector<16x256xf32>
    %172 = arith.mulf %169, %171 : vector<16x256xf32>
    %173 = arith.truncf %172 : vector<16x256xf32> to vector<16x256xbf16>
    %c8_78 = arith.constant 8 : index
    %c0_79 = arith.constant 0 : index
    %c0_80 = arith.constant 0 : index
    %174 = vector.load %arg4[%c8_78, %c0_79, %c0_80] : memref<9x16x16xbf16, #tpu.memory_space<vmem>>, vector<1x16x16xbf16>
    %175 = vector.shape_cast %174 : vector<1x16x16xbf16> to vector<16x16xbf16>
    %cst_81 = arith.constant dense<0.000000e+00> : vector<16x256xf32>
    %176 = tpu.matmul %175, %173, %cst_81 {dimension_numbers = #tpu.dot_dimension_numbers<[1], [0], [0], [1], [0, 0, 1, 1], [], []>} : vector<16x16xbf16>, vector<16x256xbf16>, vector<16x256xf32> -> vector<16x256xf32>
    %177 = arith.addf %168, %176 : vector<16x256xf32>
    %cst_82 = arith.constant dense<0.000000e+00> : vector<16xf32>
    %178 = vector.multi_reduction <add>, %177, %cst_82 [1] : vector<16x256xf32> to vector<16xf32>
    %179 = vector.shape_cast %178 : vector<16xf32> to vector<16x1xf32>
    %cst_83 = arith.constant 2.560000e+02 : f32
    %180 = vector.broadcast %cst_83 : f32 to vector<16x1xf32>
    %181 = arith.divf %179, %180 : vector<16x1xf32>
    %182 = arith.mulf %177, %177 : vector<16x256xf32>
    %cst_84 = arith.constant dense<0.000000e+00> : vector<16xf32>
    %183 = vector.multi_reduction <add>, %182, %cst_84 [1] : vector<16x256xf32> to vector<16xf32>
    %184 = vector.shape_cast %183 : vector<16xf32> to vector<16x1xf32>
    %cst_85 = arith.constant 2.560000e+02 : f32
    %185 = vector.broadcast %cst_85 : f32 to vector<16x1xf32>
    %186 = arith.divf %184, %185 : vector<16x1xf32>
    %187 = arith.mulf %181, %181 : vector<16x1xf32>
    %188 = arith.subf %186, %187 : vector<16x1xf32>
    %cst_86 = arith.constant 0.000000e+00 : f32
    %189 = vector.broadcast %cst_86 : f32 to vector<16x1xf32>
    %190 = arith.maximumf %188, %189 : vector<16x1xf32>
    %191 = vector.broadcast %181 : vector<16x1xf32> to vector<16x256xf32>
    %192 = arith.subf %177, %191 : vector<16x256xf32>
    %cst_87 = arith.constant 9.99999974E-6 : f32
    %193 = vector.broadcast %cst_87 : f32 to vector<16x1xf32>
    %194 = arith.addf %190, %193 : vector<16x1xf32>
    %195 = math.rsqrt %194 : vector<16x1xf32>
    %196 = vector.broadcast %195 : vector<16x1xf32> to vector<16x256xf32>
    %197 = arith.mulf %192, %196 : vector<16x256xf32>
    %c0_88 = arith.constant 0 : index
    %c0_89 = arith.constant 0 : index
    %198 = vector.load %arg5[%c0_88, %c0_89] : memref<16x16xbf16, #tpu.memory_space<vmem>>, vector<16x16xbf16>
    %cst_90 = arith.constant dense<0.000000e+00> : vector<16x256xf32>
    %199 = tpu.matmul %198, %3, %cst_90 {dimension_numbers = #tpu.dot_dimension_numbers<[1], [0], [0], [1], [0, 0, 1, 1], [], []>} : vector<16x16xbf16>, vector<16x256xbf16>, vector<16x256xf32> -> vector<16x256xf32>
    %cst_91 = arith.constant dense<0.000000e+00> : vector<16xf32>
    %200 = vector.multi_reduction <add>, %199, %cst_91 [1] : vector<16x256xf32> to vector<16xf32>
    %201 = vector.shape_cast %200 : vector<16xf32> to vector<16x1xf32>
    %cst_92 = arith.constant 2.560000e+02 : f32
    %202 = vector.broadcast %cst_92 : f32 to vector<16x1xf32>
    %203 = arith.divf %201, %202 : vector<16x1xf32>
    %204 = arith.mulf %199, %199 : vector<16x256xf32>
    %cst_93 = arith.constant dense<0.000000e+00> : vector<16xf32>
    %205 = vector.multi_reduction <add>, %204, %cst_93 [1] : vector<16x256xf32> to vector<16xf32>
    %206 = vector.shape_cast %205 : vector<16xf32> to vector<16x1xf32>
    %cst_94 = arith.constant 2.560000e+02 : f32
    %207 = vector.broadcast %cst_94 : f32 to vector<16x1xf32>
    %208 = arith.divf %206, %207 : vector<16x1xf32>
    %209 = arith.mulf %203, %203 : vector<16x1xf32>
    %210 = arith.subf %208, %209 : vector<16x1xf32>
    %cst_95 = arith.constant 0.000000e+00 : f32
    %211 = vector.broadcast %cst_95 : f32 to vector<16x1xf32>
    %212 = arith.maximumf %210, %211 : vector<16x1xf32>
    %213 = vector.broadcast %203 : vector<16x1xf32> to vector<16x256xf32>
    %214 = arith.subf %199, %213 : vector<16x256xf32>
    %cst_96 = arith.constant 9.99999974E-6 : f32
    %215 = vector.broadcast %cst_96 : f32 to vector<16x1xf32>
    %216 = arith.addf %212, %215 : vector<16x1xf32>
    %217 = math.rsqrt %216 : vector<16x1xf32>
    %218 = vector.broadcast %217 : vector<16x1xf32> to vector<16x256xf32>
    %219 = arith.mulf %214, %218 : vector<16x256xf32>
    %220 = arith.addf %219, %197 : vector<16x256xf32>
    %cst_97 = arith.constant 2.000000e-01 : f32
    %221 = vector.broadcast %cst_97 : f32 to vector<16x256xf32>
    %222 = arith.mulf %221, %220 : vector<16x256xf32>
    %223 = arith.maximumf %220, %222 : vector<16x256xf32>
    %c0_98 = arith.constant 0 : index
    %c0_99 = arith.constant 0 : index
    %c0_100 = arith.constant 0 : index
    %224 = vector.load %arg6[%c0_98, %c0_99, %c0_100] : memref<1x16x256xf32, #tpu.memory_space<vmem>>, vector<1x16x256xf32>
    %225 = vector.shape_cast %224 : vector<1x16x256xf32> to vector<16x256xf32>
    %226 = vector.shape_cast %223 : vector<16x256xf32> to vector<1x16x256xf32>
    tpu.vector_store %arg6[%c0_98, %c0_99, %c0_100], %226 {strides = array<i32>} : memref<1x16x256xf32, #tpu.memory_space<vmem>>, vector<1x16x256xf32>,
    return
  }
  func.func @transform_0(%arg0: i32) -> (i32, i32) {
    %c0_i32 = arith.constant 0 : i32
    %c0_i32_0 = arith.constant 0 : i32
    %c0_i32_1 = arith.constant 0 : i32
    return %c0_i32, %c0_i32_0 : i32, i32
  }
  func.func @transform_1(%arg0: i32) -> (i32, i32, i32) {
    %c0_i32 = arith.constant 0 : i32
    %c0_i32_0 = arith.constant 0 : i32
    %c0_i32_1 = arith.constant 0 : i32
    return %arg0, %c0_i32, %c0_i32_0 : i32, i32, i32
  }
  func.func @transform_2(%arg0: i32) -> (i32, i32, i32) {
    %c0_i32 = arith.constant 0 : i32
    %c0_i32_0 = arith.constant 0 : i32
    %c0_i32_1 = arith.constant 0 : i32
    %c0_i32_2 = arith.constant 0 : i32
    return %c0_i32, %c0_i32_0, %c0_i32_1 : i32, i32, i32
  }
  func.func @transform_3(%arg0: i32) -> (i32, i32, i32) {
    %c0_i32 = arith.constant 0 : i32
    %c0_i32_0 = arith.constant 0 : i32
    %c0_i32_1 = arith.constant 0 : i32
    %c0_i32_2 = arith.constant 0 : i32
    return %c0_i32, %c0_i32_0, %c0_i32_1 : i32, i32, i32
  }
  func.func @transform_4(%arg0: i32) -> (i32, i32) {
    %c0_i32 = arith.constant 0 : i32
    %c0_i32_0 = arith.constant 0 : i32
    %c0_i32_1 = arith.constant 0 : i32
    return %c0_i32, %c0_i32_0 : i32, i32
  }
  func.func @transform_5(%arg0: i32) -> (i32, i32, i32) {
    %c0_i32 = arith.constant 0 : i32
    %c0_i32_0 = arith.constant 0 : i32
    %c0_i32_1 = arith.constant 0 : i32
    return %arg0, %c0_i32, %c0_i32_0 : i32, i32, i32
  }
}

</mosaic_0001>

<llo_original>
// kernel: tpu_custom_call.1
$region0: #{tpu_custom_call.1}
  #allocation0 [shape = 'u32[]', space=smem, size = 0x4, offset = 0x4, fixed_abs, tag = 'smem constant byte address 0x4 - core index']
  #allocation1 [shape = 'u32[144,128]{1,0:T(1,128)}', space=vmem, size = 0x12000, scoped, tag = 'internal scratch']
  %s0 = inlined_call_operand.hbm [shape: f32[8,256], index: 0, kind: input, shape index: {}]
  %s1 = inlined_call_operand.hbm [shape: f32[2,16,256], index: 1, kind: input, shape index: {}]
  %s2 = inlined_call_operand.hbm [shape: bf16[9,16,16], index: 2, kind: input, shape index: {}]
  %s3 = inlined_call_operand.hbm [shape: bf16[9,16,16], index: 3, kind: input, shape index: {}]
  %s4 = inlined_call_operand.vmem [shape: bf16[16,16], index: 4, kind: input, shape index: {}]
  %s5 = inlined_call_operand.hbm [shape: f32[2,16,256], index: 5, kind: output, shape index: {}]
  %s6 = sld [smem:[#allocation0]]
  $region69: #{tpu_custom_call.1} parent=0
    _
  %s8 = ssub.s32 1, %s6
  %s9 = scalar_select 0, %s8, %s6
  $region1: #{tpu_custom_call.1} parent=0
    #allocation2 [shape = 'u8[8192]{0}', space=vmem, size = 0x2000, scoped, tag = 'input window, operand 0, single buffered']
    #allocation3 [shape = 's32[2]{0}', space=sflag, size = 0x8, scoped, tag = 'scoped memory for tpu_custom_call.1']
    #allocation4 [shape = 's32[2]{0}', space=sflag, size = 0x8, scoped, tag = 'scoped memory for tpu_custom_call.1']
    #allocation5 [shape = 'u8[32768]{0}', space=vmem, size = 0x8000, scoped, tag = 'input window, operand 1']
    #allocation6 [shape = 's32[2]{0}', space=sflag, size = 0x8, scoped, tag = 'scoped memory for tpu_custom_call.1']
    #allocation7 [shape = 'u8[36864]{0}', space=vmem, size = 0x9000, scoped, tag = 'input window, operand 2, single buffered']
    #allocation8 [shape = 'u8[36864]{0}', space=vmem, size = 0x9000, scoped, tag = 'input window, operand 3, single buffered']
    #allocation9 [shape = 's32[1]{0}', space=sflag, size = 0x4, scoped, tag = 'scoped memory for tpu_custom_call.1']
    #allocation10 [shape = 'u8[32768]{0}', space=vmem, size = 0x8000, scoped, tag = 'output window, operand 0']
    %10 = vsyncpa [#allocation3], 0
    %11 = vsyncpa [#allocation6], 0
    %s12 = scalar_lea.sflag [#allocation6], 1
    %13 = vsyncpa %s12, 0
    %14 = vsyncpa [#allocation9], 0
    %15 = vsyncpa [#allocation4], 0
    %s16 = scalar_lea.sflag [#allocation4], 1
    %17 = vsyncpa %s16, 0
    loop: start=0, step=1, limit=4
    $region2: #{tpu_custom_call.1} parent=1 // loop_pre_header
      _
    $region3: #{tpu_custom_call.1} parent=1 // loop_header
      %s19 = sphi 0, %s23
      %p20 = scmp.ge.s32.totalorder %s19, 4
      %s27 = sphi 0, %s27
      %s29 = sphi 0, %s27
      %s30 = sphi 0, %s29
      %s44 = sphi 0, %s30
      %s50 = sphi 0, %s52
      %s53 = sphi 0, %s50
      %s54 = sphi 0, %s53
      %s70 = sphi 0, %s54
      %s74 = sphi 0, %s74
      %s76 = sphi 0, %s74
      %s77 = sphi 0, %s76
      %s91 = sphi 0, %s77
      %s95 = sphi 0, %s95
      %s97 = sphi 0, %s95
      %s98 = sphi 0, %s97
      %s112 = sphi 0, %s98
      %s116 = sphi 0, %s116
      %s118 = sphi 0, %s116
      %s119 = sphi 0, %s118
      %s133 = sphi 0, %s119
      %s139 = sphi 0, %s141
      %s142 = sphi 0, %s139
      %s143 = sphi 0, %s142
      %s159 = sphi 0, %s143
    $region4: #{tpu_custom_call.1} parent=1 // loop_header_branch
      %22 = sbr.rel (%p20) target = $region8
    $region5: #{tpu_custom_call.1} parent=1 // loop_body
      %s24 = ssub.s32 %s19, 1
      %s25 = ssub.s32 %s19, 2
      %s26 = sadd.s32 %s19, 1
      %s28 = sadd.s32 %s27, 1
      %p31 = scmp.eq.s32.totalorder %s19, 1
      %p32 = scmp.ne.s32.totalorder %s27, %s29
      %p33 = scmp.eq.s32.totalorder %s19, 0
      %p34 = por %p32, %p33
      %p35 = scmp.ne.s32.totalorder %s27, %s29
      %p36 = scmp.eq.s32.totalorder %s24, 1
      %p37 = por %p35, %p36
      %p38 = scmp.ne.s32.totalorder %s29, %s30
      %p39 = scmp.eq.s32.totalorder %s24, 0
      %p40 = por %p38, %p39
      %p41 = scmp.ne.s32.totalorder %s29, %s30
      %p42 = scmp.eq.s32.totalorder %s25, 1
      %p43 = por %p41, %p42
      %p45 = scmp.ne.s32.totalorder %s30, %s44
      %p46 = scmp.eq.s32.totalorder %s25, 0
      %p47 = por %p45, %p46
      %s48 = ssub.s32 %s19, %s26
      %p49 = scmp.eq.s32.totalorder %s48, 0
      %s51 = sadd.s32 %s50, 1
      %s52 = scalar_select %p49, %s50, %s51
      %p55 = pneg %p49
      %p56 = scmp.eq.s32.totalorder %s19, 1
      %p57 = por %p55, %p56
      %p58 = scmp.ne.s32.totalorder %s50, %s53
      %p59 = scmp.eq.s32.totalorder %s19, 0
      %p60 = por %p58, %p59
      %p61 = scmp.ne.s32.totalorder %s50, %s53
      %p62 = scmp.eq.s32.totalorder %s24, 1
      %p63 = por %p61, %p62
      %p64 = scmp.ne.s32.totalorder %s53, %s54
      %p65 = scmp.eq.s32.totalorder %s24, 0
      %p66 = por %p64, %p65
      %p67 = scmp.ne.s32.totalorder %s53, %s54
      %p68 = scmp.eq.s32.totalorder %s25, 1
      %p69 = por %p67, %p68
      %p71 = scmp.ne.s32.totalorder %s54, %s70
      %p72 = scmp.eq.s32.totalorder %s25, 0
      %p73 = por %p71, %p72
      %s75 = sadd.s32 %s74, 1
      %p78 = scmp.eq.s32.totalorder %s19, 1
      %p79 = scmp.ne.s32.totalorder %s74, %s76
      %p80 = scmp.eq.s32.totalorder %s19, 0
      %p81 = por %p79, %p80
      %p82 = scmp.ne.s32.totalorder %s74, %s76
      %p83 = scmp.eq.s32.totalorder %s24, 1
      %p84 = por %p82, %p83
      %p85 = scmp.ne.s32.totalorder %s76, %s77
      %p86 = scmp.eq.s32.totalorder %s24, 0
      %p87 = por %p85, %p86
      %p88 = scmp.ne.s32.totalorder %s76, %s77
      %p89 = scmp.eq.s32.totalorder %s25, 1
      %p90 = por %p88, %p89
      %p92 = scmp.ne.s32.totalorder %s77, %s91
      %p93 = scmp.eq.s32.totalorder %s25, 0
      %p94 = por %p92, %p93
      %s96 = sadd.s32 %s95, 1
      %p99 = scmp.eq.s32.totalorder %s19, 1
      %p100 = scmp.ne.s32.totalorder %s95, %s97
      %p101 = scmp.eq.s32.totalorder %s19, 0
      %p102 = por %p100, %p101
      %p103 = scmp.ne.s32.totalorder %s95, %s97
      %p104 = scmp.eq.s32.totalorder %s24, 1
      %p105 = por %p103, %p104
      %p106 = scmp.ne.s32.totalorder %s97, %s98
      %p107 = scmp.eq.s32.totalorder %s24, 0
      %p108 = por %p106, %p107
      %p109 = scmp.ne.s32.totalorder %s97, %s98
      %p110 = scmp.eq.s32.totalorder %s25, 1
      %p111 = por %p109, %p110
      %p113 = scmp.ne.s32.totalorder %s98, %s112
      %p114 = scmp.eq.s32.totalorder %s25, 0
      %p115 = por %p113, %p114
      %s117 = sadd.s32 %s116, 1
      %p120 = scmp.eq.s32.totalorder %s19, 1
      %p121 = scmp.ne.s32.totalorder %s116, %s118
      %p122 = scmp.eq.s32.totalorder %s19, 0
      %p123 = por %p121, %p122
      %p124 = scmp.ne.s32.totalorder %s116, %s118
      %p125 = scmp.eq.s32.totalorder %s24, 1
      %p126 = por %p124, %p125
      %p127 = scmp.ne.s32.totalorder %s118, %s119
      %p128 = scmp.eq.s32.totalorder %s24, 0
      %p129 = por %p127, %p128
      %p130 = scmp.ne.s32.totalorder %s118, %s119
      %p131 = scmp.eq.s32.totalorder %s25, 1
      %p132 = por %p130, %p131
      %p134 = scmp.ne.s32.totalorder %s119, %s133
      %p135 = scmp.eq.s32.totalorder %s25, 0
      %p136 = por %p134, %p135
      %s137 = ssub.s32 %s19, %s26
      %p138 = scmp.eq.s32.totalorder %s137, 0
      %s140 = sadd.s32 %s139, 1
      %s141 = scalar_select %p138, %s139, %s140
      %p144 = pneg %p138
      %p145 = scmp.eq.s32.totalorder %s19, 1
      %p146 = por %p144, %p145
      %p147 = scmp.ne.s32.totalorder %s139, %s142
      %p148 = scmp.eq.s32.totalorder %s19, 0
      %p149 = por %p147, %p148
      %p150 = scmp.ne.s32.totalorder %s139, %s142
      %p151 = scmp.eq.s32.totalorder %s24, 1
      %p152 = por %p150, %p151
      %p153 = scmp.ne.s32.totalorder %s142, %s143
      %p154 = scmp.eq.s32.totalorder %s24, 0
      %p155 = por %p153, %p154
      %p156 = scmp.ne.s32.totalorder %s142, %s143
      %p157 = scmp.eq.s32.totalorder %s25, 1
      %p158 = por %p156, %p157
      %p160 = scmp.ne.s32.totalorder %s143, %s159
      %p161 = scmp.eq.s32.totalorder %s25, 0
      %p162 = por %p160, %p161
      %p163 = scmp.le.s32.totalorder 1, %s19
      %p164 = scmp.lt.s32.totalorder %s19, 3
      %p165 = pnand %p163, %p164
      %p166 = pneg %p165
      // Predicated region
      $region9: #{tpu_custom_call.1} parent=5 // pred_check
        _
      $region10: #{tpu_custom_call.1} parent=5 // pred_check_branch
        %168 = sbr.rel (%p165) target = $region12
      $region11: #{tpu_custom_call.1} parent=5 // pred_region
        %s169 = ssub.s32 %s19, 1
        // Predicated region
        $region13: #{tpu_custom_call.1} parent=11 // pred_check
          %p170 = pneg %p40
        $region14: #{tpu_custom_call.1} parent=11 // pred_check_branch
          %172 = sbr.rel (%p170) target = $region16
        $region15: #{tpu_custom_call.1} parent=11 // pred_region
          %s174 = ssub.s32 256, 256
          %175 = vsyncadd [#allocation3], %s174
          %s177 = sshll.u32 [#allocation2], 4
          %s178 = int_to_ptr.vmem [resolvable:$true] %s177
          %180 = dma.hbm_to_vmem [thread:$0]  %s0, 256, %s178, [#allocation3]
        $region16: #{tpu_custom_call.1} parent=11 // pred_fallthru
          _
        // Predicated region
        $region17: #{tpu_custom_call.1} parent=11 // pred_check
          %p181 = pneg %p87
        $region18: #{tpu_custom_call.1} parent=11 // pred_check_branch
          %183 = sbr.rel (%p181) target = $region20
        $region19: #{tpu_custom_call.1} parent=11 // pred_region
          %s185 = ssub.s32 1152, 1152
          %186 = vsyncadd [#allocation6], %s185
          %s187 = sshll.u32 [#allocation7], 4
          %s188 = int_to_ptr.vmem [resolvable:$true] %s187
          %193 = dma.hbm_to_vmem [thread:$0]  %s2, 1152, %s188, [#allocation6], 64, 64, 4
        $region20: #{tpu_custom_call.1} parent=11 // pred_fallthru
          _
        // Predicated region
        $region21: #{tpu_custom_call.1} parent=11 // pred_check
          %p194 = pneg %p108
        $region22: #{tpu_custom_call.1} parent=11 // pred_check_branch
          %196 = sbr.rel (%p194) target = $region24
        $region23: #{tpu_custom_call.1} parent=11 // pred_region
          %s198 = ssub.s32 1152, 1152
          %199 = vsyncadd [#allocation9], %s198
          %s200 = sshll.u32 [#allocation8], 4
          %s201 = int_to_ptr.vmem [resolvable:$true] %s200
          %206 = dma.hbm_to_vmem [thread:$0]  %s3, 1152, %s201, [#allocation9], 64, 64, 4
        $region24: #{tpu_custom_call.1} parent=11 // pred_fallthru
          _
        // Predicated region
        $region25: #{tpu_custom_call.1} parent=11 // pred_check
          %p207 = pneg %p129
        $region26: #{tpu_custom_call.1} parent=11 // pred_check_branch
          %209 = sbr.rel (%p207) target = $region28
        $region27: #{tpu_custom_call.1} parent=11 // pred_region
          _
        $region28: #{tpu_custom_call.1} parent=11 // pred_fallthru
          _
      $region12: #{tpu_custom_call.1} parent=5 // pred_fallthru
        _
      %p210 = scmp.lt.s32.totalorder %s19, 2
      // Predicated region
      $region29: #{tpu_custom_call.1} parent=5 // pred_check
        %p211 = pneg %p210
      $region30: #{tpu_custom_call.1} parent=5 // pred_check_branch
        %213 = sbr.rel (%p211) target = $region32
      $region31: #{tpu_custom_call.1} parent=5 // pred_region
        // Predicated region
        $region33: #{tpu_custom_call.1} parent=31 // pred_check
          %p214 = pneg %p60
        $region34: #{tpu_custom_call.1} parent=31 // pred_check_branch
          %216 = sbr.rel (%p214) target = $region36
        $region35: #{tpu_custom_call.1} parent=31 // pred_region
          %s217 = sand.u32 %s19, 1
          %s218 = scalar_lea.sflag [#allocation6], %s217
          %s219 = sand.u32 %s50, 1
          %s220 = smul.addr %s219, 32
          %s221 = scalar_lea.vmem [#allocation5], %s220
          %s223 = ssub.s32 512, 512
          %224 = vsyncadd %s218, %s223
          %s225 = smul.addr %s19, 4
          %s226 = smul.addr %s225, 128
          %s227 = scalar_lea.hbm %s1, %s226
          %s228 = sshll.u32 %s221, 4
          %s229 = int_to_ptr.vmem [resolvable:$true] %s228
          %234 = dma.hbm_to_vmem [thread:$0]  %s227, 512, %s229, %s218, 256, 256, 16
        $region36: #{tpu_custom_call.1} parent=31 // pred_fallthru
          _
      $region32: #{tpu_custom_call.1} parent=5 // pred_fallthru
        _
      %p235 = scmp.le.s32.totalorder 1, %s19
      %p236 = scmp.lt.s32.totalorder %s19, 3
      %p237 = pnand %p235, %p236
      %p238 = pneg %p237
      // Predicated region
      $region37: #{tpu_custom_call.1} parent=5 // pred_check
        _
      $region38: #{tpu_custom_call.1} parent=5 // pred_check_branch
        %240 = sbr.rel (%p237) target = $region40
      $region39: #{tpu_custom_call.1} parent=5 // pred_region
        %s241 = ssub.s32 %s19, 1
        // Predicated region
        $region41: #{tpu_custom_call.1} parent=39 // pred_check
          %p242 = pneg %p40
        $region42: #{tpu_custom_call.1} parent=39 // pred_check_branch
          %244 = sbr.rel (%p242) target = $region44
        $region43: #{tpu_custom_call.1} parent=39 // pred_region
          %245 = dma.done [#allocation3], 256
        $region44: #{tpu_custom_call.1} parent=39 // pred_fallthru
          _
        %s246 = sand.u32 %s24, 1
        %s247 = scalar_lea.sflag [#allocation6], %s246
        %s248 = sand.u32 %s53, 1
        %s249 = smul.addr %s248, 32
        %s250 = scalar_lea.vmem [#allocation5], %s249
        // Predicated region
        $region45: #{tpu_custom_call.1} parent=39 // pred_check
          %p251 = pneg %p66
        $region46: #{tpu_custom_call.1} parent=39 // pred_check_branch
          %253 = sbr.rel (%p251) target = $region48
        $region47: #{tpu_custom_call.1} parent=39 // pred_region
          %254 = dma.done %s247, 512
        $region48: #{tpu_custom_call.1} parent=39 // pred_fallthru
          _
        // Predicated region
        $region49: #{tpu_custom_call.1} parent=39 // pred_check
          %p255 = pneg %p87
        $region50: #{tpu_custom_call.1} parent=39 // pred_check_branch
          %257 = sbr.rel (%p255) target = $region52
        $region51: #{tpu_custom_call.1} parent=39 // pred_region
          %258 = dma.done [#allocation6], 1152
        $region52: #{tpu_custom_call.1} parent=39 // pred_fallthru
          _
        // Predicated region
        $region53: #{tpu_custom_call.1} parent=39 // pred_check
          %p259 = pneg %p108
        $region54: #{tpu_custom_call.1} parent=39 // pred_check_branch
          %261 = sbr.rel (%p259) target = $region56
        $region55: #{tpu_custom_call.1} parent=39 // pred_region
          %262 = dma.done [#allocation9], 1152
        $region56: #{tpu_custom_call.1} parent=39 // pred_fallthru
          _
        %p263 = pneg %p40
        %p264 = pneg %p37
        %s265 = sand.u32 %s24, 1
        %s266 = scalar_lea.sflag [#allocation6], %s265
        %s267 = sand.u32 %s53, 1
        %s268 = smul.addr %s267, 32
        %s269 = scalar_lea.vmem [#allocation5], %s268
        %p270 = pneg %p66
        %p271 = pneg %p63
        %p272 = pneg %p87
        %p273 = pneg %p84
        %p274 = pneg %p108
        %p275 = pneg %p105
        %p276 = pneg %p129
        %p277 = pneg %p126
        %p278 = pneg %p155
        %p279 = pneg %p152
        %s280 = sand.u32 %s142, 1
        %s281 = scalar_lea.sflag [#allocation4], %s280
        %s282 = sand.u32 %s142, 1
        %s283 = smul.addr %s282, 32
        %s284 = scalar_lea.vmem [#allocation10], %s283
        %v286 = vld [vmem:[#allocation2] sm:$0xff]
        %v287 = vld [vmem:[#allocation2 + $0x8] sm:$0xff]
        %v288 = vld [vmem:[%s250] sm:$0xff]
        %v289 = vld [vmem:[%s250 + $0x8] sm:$0xff]
        %v290 = vld [vmem:[%s250 + $0x10] sm:$0xff]
        %v291 = vld [vmem:[%s250 + $0x18] sm:$0xff]
        %v292 = vpack.c.bf16 %v290, %v288
        %v293 = vpack.c.bf16 %v291, %v289
        %294 = vrot.lane.b32.xlu0 %v288, 17
        %v295 = vpop.permute.xlu0 %294
        %296 = vrot.lane.b32.xlu0 %v290, 17
        %v297 = vpop.permute.xlu0 %296
        %298 = vrot.lane.b32.xlu0 %v289, 17
        %v299 = vpop.permute.xlu0 %298
        %300 = vrot.lane.b32.xlu0 %v291, 17
        %v301 = vpop.permute.xlu0 %300
        %v302 = vlaneseq
        %v303 = vand.u32 %v302, 127
        %vm304 = vcmp.lt.s32.totalorder %v303, 17
        %v305 = vsel %vm304, %v295, %v299
        %v306 = vsel %vm304, %v297, %v301
        %v307 = vsel %vm304, %v299, %v295
        %v308 = vsel %vm304, %v301, %v297
        %v309 = vlaneseq
        %v310 = vshrl.u32 %v309, 7
        %v311 = vsub.s32 0, %v310
        %v312 = vrot.slane %v286, %v311
        %v313 = vlaneseq
        %v314 = vshrl.u32 %v313, 7
        %v315 = vsub.s32 0, %v314
        %v316 = vrot.slane %v287, %v315
        %v317 = vmul.f32 %v307, %v312
        %v318 = vmul.f32 %v305, %v316
        %v319 = vmul.f32 %v308, %v312
        %v320 = vmul.f32 %v306, %v316
        %v321 = vpack.c.bf16 %v319, %v317
        %v322 = vpack.c.bf16 %v320, %v318
        %v323 = vld [vmem:[#allocation7] sm:$0xf]
        %v324 = vld [vmem:[#allocation7 + $0x4] sm:$0xf]
        %325 = vrot.lane.b32.xlu0 %v288, 16
        %v326 = vpop.permute.xlu0 %325
        %327 = vrot.lane.b32.xlu0 %v290, 16
        %v328 = vpop.permute.xlu0 %327
        %329 = vrot.lane.b32.xlu0 %v289, 16
        %v330 = vpop.permute.xlu0 %329
        %331 = vrot.lane.b32.xlu0 %v291, 16
        %v332 = vpop.permute.xlu0 %331
        %vm333 = vcmp.lt.s32.totalorder %v303, 16
        %v334 = vsel %vm333, %v326, %v330
        %v335 = vsel %vm333, %v328, %v332
        %v336 = vsel %vm333, %v330, %v326
        %v337 = vsel %vm333, %v332, %v328
        %v338 = vlaneseq
        %v339 = vshrl.u32 %v338, 7
        %v340 = vsub.s32 1, %v339
        %v341 = vrot.slane %v286, %v340
        %v342 = vlaneseq
        %v343 = vshrl.u32 %v342, 7
        %v344 = vsub.s32 1, %v343
        %v345 = vrot.slane %v287, %v344
        %v346 = vmul.f32 %v336, %v341
        %v347 = vmul.f32 %v334, %v345
        %v348 = vmul.f32 %v337, %v341
        %v349 = vmul.f32 %v335, %v345
        %v350 = vpack.c.bf16 %v348, %v346
        %v351 = vpack.c.bf16 %v349, %v347
        %s352 = scalar_lea.vmem [#allocation7], 8
        %v353 = vld [vmem:[%s352] sm:$0xf]
        %v354 = vld [vmem:[%s352 + $0x4] sm:$0xf]
        %v357 = vunpack.c.l.b16 %v353
        %v358 = vunpack.c.l.b16 %v354
        %v359 = vpack.c.b16 %v358, %v357
        %vm360 = vcmask 130048
        %v362 = vsel %vm360, %v359, 0
        %364 = vmatprep.subr.bf16.mxu0 %v351
        %365 = vmatpush1.bf16.msra.mxu0 %v350
        %366 = vmatprep.subr.bf16.mxu0 0
        %367 = vmatpush1.bf16.msra.mxu0 0
        %368 = vmatprep.subr.bf16.mxu0 0
        %369 = vmatpush1.bf16.msra.mxu0 0
        %370 = vmatprep.subr.bf16.mxu0 0
        %371 = vmatpush1.bf16.msra.mxu0 0
        %372 = vmatprep.subr.bf16.mxu0 0
        %373 = vmatpush1.bf16.msra.mxu0 0
        %374 = vmatprep.subr.bf16.mxu0 0
        %375 = vmatpush1.bf16.msra.mxu0 0
        %376 = vmatprep.subr.bf16.mxu0 0
        %377 = vmatpush1.bf16.msra.mxu0 0
        %378 = vmatprep.subr.bf16.mxu0 0
        %379 = vmatpush1.bf16.msra.mxu0 0
        %380 = vmatprep.subr.bf16.mxu0 0
        %381 = vmatpush1.bf16.msra.mxu0 0
        %382 = vmatprep.subr.bf16.mxu0 0
        %383 = vmatpush1.bf16.msra.mxu0 0
        %384 = vmatprep.subr.bf16.mxu0 0
        %385 = vmatpush1.bf16.msra.mxu0 0
        %386 = vmatprep.subr.bf16.mxu0 0
        %387 = vmatpush1.bf16.msra.mxu0 0
        %388 = vmatprep.subr.bf16.mxu0 0
        %389 = vmatpush1.bf16.msra.mxu0 0
        %390 = vmatprep.subr.bf16.mxu0 0
        %391 = vmatpush1.bf16.msra.mxu0 0
        %392 = vmatprep.subr.bf16.mxu0 0
        %393 = vmatpush1.bf16.msra.mxu0 0
        %394 = vmatprep.subr.bf16.mxu0 0
        %395 = vmatpush1.bf16.msra.mxu0 0
        %396 = vmatprep.mubr.bf16.mxu0 0
        %397 = vmatmul.mubr.bf16.gmra.mrb[0].mxu0 %v362
        %v398 = vpop.f32.mrb[0].mxu0
        %v399 = vadd.f32 0.0, %v398
        %v400 = vpop.f32.mrb[0].mxu0
        %v401 = vadd.f32 0.0, %v400
        %v402 = vpop.f32.mrb[0].mxu0
        %v403 = vadd.f32 0.0, %v402
        %v404 = vpop.f32.mrb[0].mxu0
        %v405 = vadd.f32 0.0, %v404
        %406 = vdwg.mxu0
        %v409 = vunpack.c.l.b16 %v323
        %v410 = vunpack.c.l.b16 %v324
        %v411 = vpack.c.b16 %v410, %v409
        %v413 = vsel %vm360, %v411, 0
        %415 = vmatprep.subr.bf16.mxu0 %v322
        %416 = vmatpush1.bf16.msra.mxu0 %v321
        %417 = vmatprep.subr.bf16.mxu0 0
        %418 = vmatpush1.bf16.msra.mxu0 0
        %419 = vmatprep.subr.bf16.mxu0 0
        %420 = vmatpush1.bf16.msra.mxu0 0
        %421 = vmatprep.subr.bf16.mxu0 0
        %422 = vmatpush1.bf16.msra.mxu0 0
        %423 = vmatprep.subr.bf16.mxu0 0
        %424 = vmatpush1.bf16.msra.mxu0 0
        %425 = vmatprep.subr.bf16.mxu0 0
        %426 = vmatpush1.bf16.msra.mxu0 0
        %427 = vmatprep.subr.bf16.mxu0 0
        %428 = vmatpush1.bf16.msra.mxu0 0
        %429 = vmatprep.subr.bf16.mxu0 0
        %430 = vmatpush1.bf16.msra.mxu0 0
        %431 = vmatprep.subr.bf16.mxu0 0
        %432 = vmatpush1.bf16.msra.mxu0 0
        %433 = vmatprep.subr.bf16.mxu0 0
        %434 = vmatpush1.bf16.msra.mxu0 0
        %435 = vmatprep.subr.bf16.mxu0 0
        %436 = vmatpush1.bf16.msra.mxu0 0
        %437 = vmatprep.subr.bf16.mxu0 0
        %438 = vmatpush1.bf16.msra.mxu0 0
        %439 = vmatprep.subr.bf16.mxu0 0
        %440 = vmatpush1.bf16.msra.mxu0 0
        %441 = vmatprep.subr.bf16.mxu0 0
        %442 = vmatpush1.bf16.msra.mxu0 0
        %443 = vmatprep.subr.bf16.mxu0 0
        %444 = vmatpush1.bf16.msra.mxu0 0
        %445 = vmatprep.subr.bf16.mxu0 0
        %446 = vmatpush1.bf16.msra.mxu0 0
        %447 = vmatprep.mubr.bf16.mxu0 0
        %448 = vmatmul.mubr.bf16.gmra.mrb[0].mxu0 %v413
        %v449 = vpop.f32.mrb[0].mxu0
        %v450 = vadd.f32 %v399, %v449
        %v451 = vpop.f32.mrb[0].mxu0
        %v452 = vadd.f32 %v401, %v451
        %v453 = vpop.f32.mrb[0].mxu0
        %v454 = vadd.f32 %v403, %v453
        %v455 = vpop.f32.mrb[0].mxu0
        %v456 = vadd.f32 %v405, %v455
        %457 = vdwg.mxu0
        %458 = vrot.lane.b32.xlu0 %v288, 15
        %v459 = vpop.permute.xlu0 %458
        %460 = vrot.lane.b32.xlu0 %v290, 15
        %v461 = vpop.permute.xlu0 %460
        %462 = vrot.lane.b32.xlu0 %v289, 15
        %v463 = vpop.permute.xlu0 %462
        %464 = vrot.lane.b32.xlu0 %v291, 15
        %v465 = vpop.permute.xlu0 %464
        %vm466 = vcmp.lt.s32.totalorder %v303, 15
        %v467 = vsel %vm466, %v459, %v463
        %v468 = vsel %vm466, %v461, %v465
        %v469 = vsel %vm466, %v463, %v459
        %v470 = vsel %vm466, %v465, %v461
        %v471 = vlaneseq
        %v472 = vshrl.u32 %v471, 7
        %v473 = vsub.s32 2, %v472
        %v474 = vrot.slane %v286, %v473
        %v475 = vlaneseq
        %v476 = vshrl.u32 %v475, 7
        %v477 = vsub.s32 2, %v476
        %v478 = vrot.slane %v287, %v477
        %v479 = vmul.f32 %v469, %v474
        %v480 = vmul.f32 %v467, %v478
        %v481 = vmul.f32 %v470, %v474
        %v482 = vmul.f32 %v468, %v478
        %v483 = vpack.c.bf16 %v481, %v479
        %v484 = vpack.c.bf16 %v482, %v480
        %s485 = scalar_lea.vmem [#allocation7], 16
        %v486 = vld [vmem:[%s485] sm:$0xf]
        %v487 = vld [vmem:[%s485 + $0x4] sm:$0xf]
        %v490 = vunpack.c.l.b16 %v486
        %v491 = vunpack.c.l.b16 %v487
        %v492 = vpack.c.b16 %v491, %v490
        %v494 = vsel %vm360, %v492, 0
        %496 = vmatprep.subr.bf16.mxu0 %v484
        %497 = vmatpush1.bf16.msra.mxu0 %v483
        %498 = vmatprep.subr.bf16.mxu0 0
        %499 = vmatpush1.bf16.msra.mxu0 0
        %500 = vmatprep.subr.bf16.mxu0 0
        %501 = vmatpush1.bf16.msra.mxu0 0
        %502 = vmatprep.subr.bf16.mxu0 0
        %503 = vmatpush1.bf16.msra.mxu0 0
        %504 = vmatprep.subr.bf16.mxu0 0
        %505 = vmatpush1.bf16.msra.mxu0 0
        %506 = vmatprep.subr.bf16.mxu0 0
        %507 = vmatpush1.bf16.msra.mxu0 0
        %508 = vmatprep.subr.bf16.mxu0 0
        %509 = vmatpush1.bf16.msra.mxu0 0
        %510 = vmatprep.subr.bf16.mxu0 0
        %511 = vmatpush1.bf16.msra.mxu0 0
        %512 = vmatprep.subr.bf16.mxu0 0
        %513 = vmatpush1.bf16.msra.mxu0 0
        %514 = vmatprep.subr.bf16.mxu0 0
        %515 = vmatpush1.bf16.msra.mxu0 0
        %516 = vmatprep.subr.bf16.mxu0 0
        %517 = vmatpush1.bf16.msra.mxu0 0
        %518 = vmatprep.subr.bf16.mxu0 0
        %519 = vmatpush1.bf16.msra.mxu0 0
        %520 = vmatprep.subr.bf16.mxu0 0
        %521 = vmatpush1.bf16.msra.mxu0 0
        %522 = vmatprep.subr.bf16.mxu0 0
        %523 = vmatpush1.bf16.msra.mxu0 0
        %524 = vmatprep.subr.bf16.mxu0 0
        %525 = vmatpush1.bf16.msra.mxu0 0
        %526 = vmatprep.subr.bf16.mxu0 0
        %527 = vmatpush1.bf16.msra.mxu0 0
        %528 = vmatprep.mubr.bf16.mxu0 0
        %529 = vmatmul.mubr.bf16.gmra.mrb[0].mxu0 %v494
        %v530 = vpop.f32.mrb[0].mxu0
        %v531 = vadd.f32 0.0, %v530
        %v532 = vpop.f32.mrb[0].mxu0
        %v533 = vadd.f32 0.0, %v532
        %v534 = vpop.f32.mrb[0].mxu0
        %v535 = vadd.f32 0.0, %v534
        %v536 = vpop.f32.mrb[0].mxu0
        %v537 = vadd.f32 0.0, %v536
        %538 = vdwg.mxu0
        %v539 = vadd.f32 %v450, %v531
        %v540 = vadd.f32 %v452, %v533
        %v541 = vadd.f32 %v454, %v535
        %v542 = vadd.f32 %v456, %v537
        %543 = vrot.lane.b32.xlu0 %v288, 1
        %v544 = vpop.permute.xlu0 %543
        %545 = vrot.lane.b32.xlu0 %v290, 1
        %v546 = vpop.permute.xlu0 %545
        %547 = vrot.lane.b32.xlu0 %v289, 1
        %v548 = vpop.permute.xlu0 %547
        %549 = vrot.lane.b32.xlu0 %v291, 1
        %v550 = vpop.permute.xlu0 %549
        %vm551 = vcmp.lt.s32.totalorder %v303, 1
        %v552 = vsel %vm551, %v544, %v548
        %v553 = vsel %vm551, %v546, %v550
        %v554 = vsel %vm551, %v548, %v544
        %v555 = vsel %vm551, %v550, %v546
        %v556 = vlaneseq
        %v557 = vshrl.u32 %v556, 7
        %v558 = vsub.s32 3, %v557
        %v559 = vrot.slane %v286, %v558
        %v560 = vlaneseq
        %v561 = vshrl.u32 %v560, 7
        %v562 = vsub.s32 3, %v561
        %v563 = vrot.slane %v287, %v562
        %v564 = vmul.f32 %v554, %v559
        %v565 = vmul.f32 %v552, %v563
        %v566 = vmul.f32 %v555, %v559
        %v567 = vmul.f32 %v553, %v563
        %v568 = vpack.c.bf16 %v566, %v564
        %v569 = vpack.c.bf16 %v567, %v565
        %s570 = scalar_lea.vmem [#allocation7], 24
        %v571 = vld [vmem:[%s570] sm:$0xf]
        %v572 = vld [vmem:[%s570 + $0x4] sm:$0xf]
        %v575 = vunpack.c.l.b16 %v571
        %v576 = vunpack.c.l.b16 %v572
        %v577 = vpack.c.b16 %v576, %v575
        %v579 = vsel %vm360, %v577, 0
        %581 = vmatprep.subr.bf16.mxu0 %v569
        %582 = vmatpush1.bf16.msra.mxu0 %v568
        %583 = vmatprep.subr.bf16.mxu0 0
        %584 = vmatpush1.bf16.msra.mxu0 0
        %585 = vmatprep.subr.bf16.mxu0 0
        %586 = vmatpush1.bf16.msra.mxu0 0
        %587 = vmatprep.subr.bf16.mxu0 0
        %588 = vmatpush1.bf16.msra.mxu0 0
        %589 = vmatprep.subr.bf16.mxu0 0
        %590 = vmatpush1.bf16.msra.mxu0 0
        %591 = vmatprep.subr.bf16.mxu0 0
        %592 = vmatpush1.bf16.msra.mxu0 0
        %593 = vmatprep.subr.bf16.mxu0 0
        %594 = vmatpush1.bf16.msra.mxu0 0
        %595 = vmatprep.subr.bf16.mxu0 0
        %596 = vmatpush1.bf16.msra.mxu0 0
        %597 = vmatprep.subr.bf16.mxu0 0
        %598 = vmatpush1.bf16.msra.mxu0 0
        %599 = vmatprep.subr.bf16.mxu0 0
        %600 = vmatpush1.bf16.msra.mxu0 0
        %601 = vmatprep.subr.bf16.mxu0 0
        %602 = vmatpush1.bf16.msra.mxu0 0
        %603 = vmatprep.subr.bf16.mxu0 0
        %604 = vmatpush1.bf16.msra.mxu0 0
        %605 = vmatprep.subr.bf16.mxu0 0
        %606 = vmatpush1.bf16.msra.mxu0 0
        %607 = vmatprep.subr.bf16.mxu0 0
        %608 = vmatpush1.bf16.msra.mxu0 0
        %609 = vmatprep.subr.bf16.mxu0 0
        %610 = vmatpush1.bf16.msra.mxu0 0
        %611 = vmatprep.subr.bf16.mxu0 0
        %612 = vmatpush1.bf16.msra.mxu0 0
        %613 = vmatprep.mubr.bf16.mxu0 0
        %614 = vmatmul.mubr.bf16.gmra.mrb[0].mxu0 %v579
        %v615 = vpop.f32.mrb[0].mxu0
        %v616 = vadd.f32 0.0, %v615
        %v617 = vpop.f32.mrb[0].mxu0
        %v618 = vadd.f32 0.0, %v617
        %v619 = vpop.f32.mrb[0].mxu0
        %v620 = vadd.f32 0.0, %v619
        %v621 = vpop.f32.mrb[0].mxu0
        %v622 = vadd.f32 0.0, %v621
        %623 = vdwg.mxu0
        %v624 = vadd.f32 %v539, %v616
        %v625 = vadd.f32 %v540, %v618
        %v626 = vadd.f32 %v541, %v620
        %v627 = vadd.f32 %v542, %v622
        %s628 = scalar_lea.vmem [#allocation7], 32
        %v629 = vld [vmem:[%s628] sm:$0xf]
        %v630 = vld [vmem:[%s628 + $0x4] sm:$0xf]
        %v633 = vunpack.c.l.b16 %v629
        %v634 = vunpack.c.l.b16 %v630
        %v635 = vpack.c.b16 %v634, %v633
        %v637 = vsel %vm360, %v635, 0
        %639 = vmatprep.subr.bf16.mxu0 %v293
        %640 = vmatpush1.bf16.msra.mxu0 %v292
        %641 = vmatprep.subr.bf16.mxu0 0
        %642 = vmatpush1.bf16.msra.mxu0 0
        %643 = vmatprep.subr.bf16.mxu0 0
        %644 = vmatpush1.bf16.msra.mxu0 0
        %645 = vmatprep.subr.bf16.mxu0 0
        %646 = vmatpush1.bf16.msra.mxu0 0
        %647 = vmatprep.subr.bf16.mxu0 0
        %648 = vmatpush1.bf16.msra.mxu0 0
        %649 = vmatprep.subr.bf16.mxu0 0
        %650 = vmatpush1.bf16.msra.mxu0 0
        %651 = vmatprep.subr.bf16.mxu0 0
        %652 = vmatpush1.bf16.msra.mxu0 0
        %653 = vmatprep.subr.bf16.mxu0 0
        %654 = vmatpush1.bf16.msra.mxu0 0
        %655 = vmatprep.subr.bf16.mxu0 0
        %656 = vmatpush1.bf16.msra.mxu0 0
        %657 = vmatprep.subr.bf16.mxu0 0
        %658 = vmatpush1.bf16.msra.mxu0 0
        %659 = vmatprep.subr.bf16.mxu0 0
        %660 = vmatpush1.bf16.msra.mxu0 0
        %661 = vmatprep.subr.bf16.mxu0 0
        %662 = vmatpush1.bf16.msra.mxu0 0
        %663 = vmatprep.subr.bf16.mxu0 0
        %664 = vmatpush1.bf16.msra.mxu0 0
        %665 = vmatprep.subr.bf16.mxu0 0
        %666 = vmatpush1.bf16.msra.mxu0 0
        %667 = vmatprep.subr.bf16.mxu0 0
        %668 = vmatpush1.bf16.msra.mxu0 0
        %669 = vmatprep.subr.bf16.mxu0 0
        %670 = vmatpush1.bf16.msra.mxu0 0
        %671 = vmatprep.mubr.bf16.mxu0 0
        %672 = vmatmul.mubr.bf16.gmra.mrb[0].mxu0 %v637
        %v673 = vpop.f32.mrb[0].mxu0
        %v674 = vadd.f32 0.0, %v673
        %v675 = vpop.f32.mrb[0].mxu0
        %v676 = vadd.f32 0.0, %v675
        %v677 = vpop.f32.mrb[0].mxu0
        %v678 = vadd.f32 0.0, %v677
        %v679 = vpop.f32.mrb[0].mxu0
        %v680 = vadd.f32 0.0, %v679
        %681 = vdwg.mxu0
        %v682 = vadd.f32 %v624, %v674
        %v683 = vadd.f32 %v625, %v676
        %v684 = vadd.f32 %v626, %v678
        %v685 = vadd.f32 %v627, %v680
        %686 = vrot.lane.b32.xlu0 %v288, 127
        %v687 = vpop.permute.xlu0 %686
        %688 = vrot.lane.b32.xlu0 %v290, 127
        %v689 = vpop.permute.xlu0 %688
        %690 = vrot.lane.b32.xlu0 %v289, 127
        %v691 = vpop.permute.xlu0 %690
        %692 = vrot.lane.b32.xlu0 %v291, 127
        %v693 = vpop.permute.xlu0 %692
        %vm694 = vcmp.lt.s32.totalorder %v303, 127
        %v695 = vsel %vm694, %v687, %v691
        %v696 = vsel %vm694, %v689, %v693
        %v697 = vsel %vm694, %v691, %v687
        %v698 = vsel %vm694, %v693, %v689
        %v699 = vlaneseq
        %v700 = vshrl.u32 %v699, 7
        %v701 = vsub.s32 4, %v700
        %v702 = vrot.slane %v286, %v701
        %v703 = vlaneseq
        %v704 = vshrl.u32 %v703, 7
        %v705 = vsub.s32 4, %v704
        %v706 = vrot.slane %v287, %v705
        %v707 = vmul.f32 %v695, %v702
        %v708 = vmul.f32 %v697, %v706
        %v709 = vmul.f32 %v696, %v702
        %v710 = vmul.f32 %v698, %v706
        %v711 = vpack.c.bf16 %v709, %v707
        %v712 = vpack.c.bf16 %v710, %v708
        %s713 = scalar_lea.vmem [#allocation7], 40
        %v714 = vld [vmem:[%s713] sm:$0xf]
        %v715 = vld [vmem:[%s713 + $0x4] sm:$0xf]
        %v718 = vunpack.c.l.b16 %v714
        %v719 = vunpack.c.l.b16 %v715
        %v720 = vpack.c.b16 %v719, %v718
        %v722 = vsel %vm360, %v720, 0
        %724 = vmatprep.subr.bf16.mxu0 %v712
        %725 = vmatpush1.bf16.msra.mxu0 %v711
        %726 = vmatprep.subr.bf16.mxu0 0
        %727 = vmatpush1.bf16.msra.mxu0 0
        %728 = vmatprep.subr.bf16.mxu0 0
        %729 = vmatpush1.bf16.msra.mxu0 0
        %730 = vmatprep.subr.bf16.mxu0 0
        %731 = vmatpush1.bf16.msra.mxu0 0
        %732 = vmatprep.subr.bf16.mxu0 0
        %733 = vmatpush1.bf16.msra.mxu0 0
        %734 = vmatprep.subr.bf16.mxu0 0
        %735 = vmatpush1.bf16.msra.mxu0 0
        %736 = vmatprep.subr.bf16.mxu0 0
        %737 = vmatpush1.bf16.msra.mxu0 0
        %738 = vmatprep.subr.bf16.mxu0 0
        %739 = vmatpush1.bf16.msra.mxu0 0
        %740 = vmatprep.subr.bf16.mxu0 0
        %741 = vmatpush1.bf16.msra.mxu0 0
        %742 = vmatprep.subr.bf16.mxu0 0
        %743 = vmatpush1.bf16.msra.mxu0 0
        %744 = vmatprep.subr.bf16.mxu0 0
        %745 = vmatpush1.bf16.msra.mxu0 0
        %746 = vmatprep.subr.bf16.mxu0 0
        %747 = vmatpush1.bf16.msra.mxu0 0
        %748 = vmatprep.subr.bf16.mxu0 0
        %749 = vmatpush1.bf16.msra.mxu0 0
        %750 = vmatprep.subr.bf16.mxu0 0
        %751 = vmatpush1.bf16.msra.mxu0 0
        %752 = vmatprep.subr.bf16.mxu0 0
        %753 = vmatpush1.bf16.msra.mxu0 0
        %754 = vmatprep.subr.bf16.mxu0 0
        %755 = vmatpush1.bf16.msra.mxu0 0
        %756 = vmatprep.mubr.bf16.mxu0 0
        %757 = vmatmul.mubr.bf16.gmra.mrb[0].mxu0 %v722
        %v758 = vpop.f32.mrb[0].mxu0
        %v759 = vadd.f32 0.0, %v758
        %v760 = vpop.f32.mrb[0].mxu0
        %v761 = vadd.f32 0.0, %v760
        %v762 = vpop.f32.mrb[0].mxu0
        %v763 = vadd.f32 0.0, %v762
        %v764 = vpop.f32.mrb[0].mxu0
        %v765 = vadd.f32 0.0, %v764
        %766 = vdwg.mxu0
        %v767 = vadd.f32 %v682, %v759
        %v768 = vadd.f32 %v683, %v761
        %v769 = vadd.f32 %v684, %v763
        %v770 = vadd.f32 %v685, %v765
        %771 = vrot.lane.b32.xlu0 %v288, 113
        %v772 = vpop.permute.xlu0 %771
        %773 = vrot.lane.b32.xlu0 %v290, 113
        %v774 = vpop.permute.xlu0 %773
        %775 = vrot.lane.b32.xlu0 %v289, 113
        %v776 = vpop.permute.xlu0 %775
        %777 = vrot.lane.b32.xlu0 %v291, 113
        %v778 = vpop.permute.xlu0 %777
        %vm779 = vcmp.lt.s32.totalorder %v303, 113
        %v780 = vsel %vm779, %v772, %v776
        %v781 = vsel %vm779, %v774, %v778
        %v782 = vsel %vm779, %v776, %v772
        %v783 = vsel %vm779, %v778, %v774
        %v784 = vlaneseq
        %v785 = vshrl.u32 %v784, 7
        %v786 = vsub.s32 5, %v785
        %v787 = vrot.slane %v286, %v786
        %v788 = vlaneseq
        %v789 = vshrl.u32 %v788, 7
        %v790 = vsub.s32 5, %v789
        %v791 = vrot.slane %v287, %v790
        %v792 = vmul.f32 %v780, %v787
        %v793 = vmul.f32 %v782, %v791
        %v794 = vmul.f32 %v781, %v787
        %v795 = vmul.f32 %v783, %v791
        %v796 = vpack.c.bf16 %v794, %v792
        %v797 = vpack.c.bf16 %v795, %v793
        %s798 = scalar_lea.vmem [#allocation7], 48
        %v799 = vld [vmem:[%s798] sm:$0xf]
        %v800 = vld [vmem:[%s798 + $0x4] sm:$0xf]
        %v803 = vunpack.c.l.b16 %v799
        %v804 = vunpack.c.l.b16 %v800
        %v805 = vpack.c.b16 %v804, %v803
        %v807 = vsel %vm360, %v805, 0
        %809 = vmatprep.subr.bf16.mxu0 %v797
        %810 = vmatpush1.bf16.msra.mxu0 %v796
        %811 = vmatprep.subr.bf16.mxu0 0
        %812 = vmatpush1.bf16.msra.mxu0 0
        %813 = vmatprep.subr.bf16.mxu0 0
        %814 = vmatpush1.bf16.msra.mxu0 0
        %815 = vmatprep.subr.bf16.mxu0 0
        %816 = vmatpush1.bf16.msra.mxu0 0
        %817 = vmatprep.subr.bf16.mxu0 0
        %818 = vmatpush1.bf16.msra.mxu0 0
        %819 = vmatprep.subr.bf16.mxu0 0
        %820 = vmatpush1.bf16.msra.mxu0 0
        %821 = vmatprep.subr.bf16.mxu0 0
        %822 = vmatpush1.bf16.msra.mxu0 0
        %823 = vmatprep.subr.bf16.mxu0 0
        %824 = vmatpush1.bf16.msra.mxu0 0
        %825 = vmatprep.subr.bf16.mxu0 0
        %826 = vmatpush1.bf16.msra.mxu0 0
        %827 = vmatprep.subr.bf16.mxu0 0
        %828 = vmatpush1.bf16.msra.mxu0 0
        %829 = vmatprep.subr.bf16.mxu0 0
        %830 = vmatpush1.bf16.msra.mxu0 0
        %831 = vmatprep.subr.bf16.mxu0 0
        %832 = vmatpush1.bf16.msra.mxu0 0
        %833 = vmatprep.subr.bf16.mxu0 0
        %834 = vmatpush1.bf16.msra.mxu0 0
        %835 = vmatprep.subr.bf16.mxu0 0
        %836 = vmatpush1.bf16.msra.mxu0 0
        %837 = vmatprep.subr.bf16.mxu0 0
        %838 = vmatpush1.bf16.msra.mxu0 0
        %839 = vmatprep.subr.bf16.mxu0 0
        %840 = vmatpush1.bf16.msra.mxu0 0
        %841 = vmatprep.mubr.bf16.mxu0 0
        %842 = vmatmul.mubr.bf16.gmra.mrb[0].mxu0 %v807
        %v843 = vpop.f32.mrb[0].mxu0
        %v844 = vadd.f32 0.0, %v843
        %v845 = vpop.f32.mrb[0].mxu0
        %v846 = vadd.f32 0.0, %v845
        %v847 = vpop.f32.mrb[0].mxu0
        %v848 = vadd.f32 0.0, %v847
        %v849 = vpop.f32.mrb[0].mxu0
        %v850 = vadd.f32 0.0, %v849
        %851 = vdwg.mxu0
        %v852 = vadd.f32 %v767, %v844
        %v853 = vadd.f32 %v768, %v846
        %v854 = vadd.f32 %v769, %v848
        %v855 = vadd.f32 %v770, %v850
        %856 = vrot.lane.b32.xlu0 %v288, 112
        %v857 = vpop.permute.xlu0 %856
        %858 = vrot.lane.b32.xlu0 %v290, 112
        %v859 = vpop.permute.xlu0 %858
        %860 = vrot.lane.b32.xlu0 %v289, 112
        %v861 = vpop.permute.xlu0 %860
        %862 = vrot.lane.b32.xlu0 %v291, 112
        %v863 = vpop.permute.xlu0 %862
        %vm864 = vcmp.lt.s32.totalorder %v303, 112
        %v865 = vsel %vm864, %v857, %v861
        %v866 = vsel %vm864, %v859, %v863
        %v867 = vsel %vm864, %v861, %v857
        %v868 = vsel %vm864, %v863, %v859
        %v869 = vlaneseq
        %v870 = vshrl.u32 %v869, 7
        %v871 = vsub.s32 6, %v870
        %v872 = vrot.slane %v286, %v871
        %v873 = vlaneseq
        %v874 = vshrl.u32 %v873, 7
        %v875 = vsub.s32 6, %v874
        %v876 = vrot.slane %v287, %v875
        %v877 = vmul.f32 %v865, %v872
        %v878 = vmul.f32 %v867, %v876
        %v879 = vmul.f32 %v866, %v872
        %v880 = vmul.f32 %v868, %v876
        %v881 = vpack.c.bf16 %v879, %v877
        %v882 = vpack.c.bf16 %v880, %v878
        %s883 = scalar_lea.vmem [#allocation7], 56
        %v884 = vld [vmem:[%s883] sm:$0xf]
        %v885 = vld [vmem:[%s883 + $0x4] sm:$0xf]
        %v888 = vunpack.c.l.b16 %v884
        %v889 = vunpack.c.l.b16 %v885
        %v890 = vpack.c.b16 %v889, %v888
        %v892 = vsel %vm360, %v890, 0
        %894 = vmatprep.subr.bf16.mxu0 %v882
        %895 = vmatpush1.bf16.msra.mxu0 %v881
        %896 = vmatprep.subr.bf16.mxu0 0
        %897 = vmatpush1.bf16.msra.mxu0 0
        %898 = vmatprep.subr.bf16.mxu0 0
        %899 = vmatpush1.bf16.msra.mxu0 0
        %900 = vmatprep.subr.bf16.mxu0 0
        %901 = vmatpush1.bf16.msra.mxu0 0
        %902 = vmatprep.subr.bf16.mxu0 0
        %903 = vmatpush1.bf16.msra.mxu0 0
        %904 = vmatprep.subr.bf16.mxu0 0
        %905 = vmatpush1.bf16.msra.mxu0 0
        %906 = vmatprep.subr.bf16.mxu0 0
        %907 = vmatpush1.bf16.msra.mxu0 0
        %908 = vmatprep.subr.bf16.mxu0 0
        %909 = vmatpush1.bf16.msra.mxu0 0
        %910 = vmatprep.subr.bf16.mxu0 0
        %911 = vmatpush1.bf16.msra.mxu0 0
        %912 = vmatprep.subr.bf16.mxu0 0
        %913 = vmatpush1.bf16.msra.mxu0 0
        %914 = vmatprep.subr.bf16.mxu0 0
        %915 = vmatpush1.bf16.msra.mxu0 0
        %916 = vmatprep.subr.bf16.mxu0 0
        %917 = vmatpush1.bf16.msra.mxu0 0
        %918 = vmatprep.subr.bf16.mxu0 0
        %919 = vmatpush1.bf16.msra.mxu0 0
        %920 = vmatprep.subr.bf16.mxu0 0
        %921 = vmatpush1.bf16.msra.mxu0 0
        %922 = vmatprep.subr.bf16.mxu0 0
        %923 = vmatpush1.bf16.msra.mxu0 0
        %924 = vmatprep.subr.bf16.mxu0 0
        %925 = vmatpush1.bf16.msra.mxu0 0
        %926 = vmatprep.mubr.bf16.mxu0 0
        %927 = vmatmul.mubr.bf16.gmra.mrb[0].mxu0 %v892
        %v928 = vpop.f32.mrb[0].mxu0
        %v929 = vadd.f32 0.0, %v928
        %v930 = vpop.f32.mrb[0].mxu0
        %v931 = vadd.f32 0.0, %v930
        %v932 = vpop.f32.mrb[0].mxu0
        %v933 = vadd.f32 0.0, %v932
        %v934 = vpop.f32.mrb[0].mxu0
        %v935 = vadd.f32 0.0, %v934
        %936 = vdwg.mxu0
        %v937 = vadd.f32 %v852, %v929
        %v938 = vadd.f32 %v853, %v931
        %v939 = vadd.f32 %v854, %v933
        %v940 = vadd.f32 %v855, %v935
        %941 = vrot.lane.b32.xlu0 %v288, 111
        %v942 = vpop.permute.xlu0 %941
        %943 = vrot.lane.b32.xlu0 %v290, 111
        %v944 = vpop.permute.xlu0 %943
        %945 = vrot.lane.b32.xlu0 %v289, 111
        %v946 = vpop.permute.xlu0 %945
        %947 = vrot.lane.b32.xlu0 %v291, 111
        %v948 = vpop.permute.xlu0 %947
        %vm949 = vcmp.lt.s32.totalorder %v303, 111
        %v950 = vsel %vm949, %v942, %v946
        %v951 = vsel %vm949, %v944, %v948
        %v952 = vsel %vm949, %v946, %v942
        %v953 = vsel %vm949, %v948, %v944
        %v954 = vlaneseq
        %v955 = vshrl.u32 %v954, 7
        %v956 = vsub.s32 7, %v955
        %v957 = vrot.slane %v286, %v956
        %v958 = vlaneseq
        %v959 = vshrl.u32 %v958, 7
        %v960 = vsub.s32 7, %v959
        %v961 = vrot.slane %v287, %v960
        %v962 = vmul.f32 %v950, %v957
        %v963 = vmul.f32 %v952, %v961
        %v964 = vmul.f32 %v951, %v957
        %v965 = vmul.f32 %v953, %v961
        %v966 = vpack.c.bf16 %v964, %v962
        %v967 = vpack.c.bf16 %v965, %v963
        %s968 = scalar_lea.vmem [#allocation7], 64
        %v969 = vld [vmem:[%s968] sm:$0xf]
        %v970 = vld [vmem:[%s968 + $0x4] sm:$0xf]
        %v973 = vunpack.c.l.b16 %v969
        %v974 = vunpack.c.l.b16 %v970
        %v975 = vpack.c.b16 %v974, %v973
        %v977 = vsel %vm360, %v975, 0
        %979 = vmatprep.subr.bf16.mxu0 %v967
        %980 = vmatpush1.bf16.msra.mxu0 %v966
        %981 = vmatprep.subr.bf16.mxu0 0
        %982 = vmatpush1.bf16.msra.mxu0 0
        %983 = vmatprep.subr.bf16.mxu0 0
        %984 = vmatpush1.bf16.msra.mxu0 0
        %985 = vmatprep.subr.bf16.mxu0 0
        %986 = vmatpush1.bf16.msra.mxu0 0
        %987 = vmatprep.subr.bf16.mxu0 0
        %988 = vmatpush1.bf16.msra.mxu0 0
        %989 = vmatprep.subr.bf16.mxu0 0
        %990 = vmatpush1.bf16.msra.mxu0 0
        %991 = vmatprep.subr.bf16.mxu0 0
        %992 = vmatpush1.bf16.msra.mxu0 0
        %993 = vmatprep.subr.bf16.mxu0 0
        %994 = vmatpush1.bf16.msra.mxu0 0
        %995 = vmatprep.subr.bf16.mxu0 0
        %996 = vmatpush1.bf16.msra.mxu0 0
        %997 = vmatprep.subr.bf16.mxu0 0
        %998 = vmatpush1.bf16.msra.mxu0 0
        %999 = vmatprep.subr.bf16.mxu0 0
        %1000 = vmatpush1.bf16.msra.mxu0 0
        %1001 = vmatprep.subr.bf16.mxu0 0
        %1002 = vmatpush1.bf16.msra.mxu0 0
        %1003 = vmatprep.subr.bf16.mxu0 0
        %1004 = vmatpush1.bf16.msra.mxu0 0
        %1005 = vmatprep.subr.bf16.mxu0 0
        %1006 = vmatpush1.bf16.msra.mxu0 0
        %1007 = vmatprep.subr.bf16.mxu0 0
        %1008 = vmatpush1.bf16.msra.mxu0 0
        %1009 = vmatprep.subr.bf16.mxu0 0
        %1010 = vmatpush1.bf16.msra.mxu0 0
        %1011 = vmatprep.mubr.bf16.mxu0 0
        %1012 = vmatmul.mubr.bf16.gmra.mrb[0].mxu0 %v977
        %v1013 = vpop.f32.mrb[0].mxu0
        %v1014 = vadd.f32 0.0, %v1013
        %v1015 = vpop.f32.mrb[0].mxu0
        %v1016 = vadd.f32 0.0, %v1015
        %v1017 = vpop.f32.mrb[0].mxu0
        %v1018 = vadd.f32 0.0, %v1017
        %v1019 = vpop.f32.mrb[0].mxu0
        %v1020 = vadd.f32 0.0, %v1019
        %1021 = vdwg.mxu0
        %v1022 = vadd.f32 %v937, %v1014
        %v1023 = vadd.f32 %v938, %v1016
        %v1024 = vadd.f32 %v939, %v1018
        %v1025 = vadd.f32 %v940, %v1020
        %v1026 = vadd.f32 %v1022, %v1023
        %1027 = vadd.xlane.f32.xlu0 %v1026
        %v1028 = vpop.xlane.xlu0 %1027
        %v1029 = vadd.f32 %v1024, %v1025
        %1030 = vadd.xlane.f32.xlu0 %v1029
        %v1031 = vpop.xlane.xlu0 %1030
        %v1032 = vrcp.pop 256.0
        %v1033 = vmul.f32 %v1028, %v1032
        %v1034 = vmul.f32 %v1031, %v1032
        %v1035 = vmul.f32 %v1022, %v1022
        %v1036 = vmul.f32 %v1023, %v1023
        %v1037 = vmul.f32 %v1024, %v1024
        %v1038 = vmul.f32 %v1025, %v1025
        %v1039 = vadd.f32 %v1035, %v1036
        %1040 = vadd.xlane.f32.xlu0 %v1039
        %v1041 = vpop.xlane.xlu0 %1040
        %v1042 = vadd.f32 %v1037, %v1038
        %1043 = vadd.xlane.f32.xlu0 %v1042
        %v1044 = vpop.xlane.xlu0 %1043
        %v1045 = vmul.f32 %v1041, %v1032
        %v1046 = vmul.f32 %v1044, %v1032
        %v1047 = vmul.f32 %v1033, %v1033
        %v1048 = vmul.f32 %v1034, %v1034
        %v1049 = vsub.f32 %v1045, %v1047
        %v1050 = vsub.f32 %v1046, %v1048
        %v1051 = vmax.f32 %v1049, 0.0
        %v1052 = vmax.f32 %v1050, 0.0
        %v1053 = vsub.f32 %v1022, %v1033
        %v1054 = vsub.f32 %v1023, %v1033
        %v1055 = vsub.f32 %v1024, %v1034
        %v1056 = vsub.f32 %v1025, %v1034
        %v1057 = vadd.f32 %v1051, 1e-05
        %v1058 = vadd.f32 %v1052, 1e-05
        %v1059 = vrsqrt.pop %v1057
        %v1060 = vrsqrt.pop %v1058
        %v1061 = vmul.f32 %v1053, %v1059
        %v1062 = vmul.f32 %v1054, %v1059
        %v1063 = vmul.f32 %v1055, %v1060
        %v1064 = vmul.f32 %v1056, %v1060
        %v1065 = vmul.f32 %v1061, 0.2
        %v1066 = vmul.f32 %v1062, 0.2
        %v1067 = vmul.f32 %v1063, 0.2
        %v1068 = vmul.f32 %v1064, 0.2
        %v1069 = vmax.f32 %v1061, %v1065
        %v1070 = vmax.f32 %v1062, %v1066
        %v1071 = vmax.f32 %v1063, %v1067
        %v1072 = vmax.f32 %v1064, %v1068
        %v1073 = vpack.c.bf16 %v1071, %v1069
        %v1074 = vpack.c.bf16 %v1072, %v1070
        %1075 = vrot.lane.b32.xlu0 %v1069, 17
        %v1076 = vpop.permute.xlu0 %1075
        %1077 = vrot.lane.b32.xlu0 %v1071, 17
        %v1078 = vpop.permute.xlu0 %1077
        %1079 = vrot.lane.b32.xlu0 %v1070, 17
        %v1080 = vpop.permute.xlu0 %1079
        %1081 = vrot.lane.b32.xlu0 %v1072, 17
        %v1082 = vpop.permute.xlu0 %1081
        %v1083 = vsel %vm304, %v1076, %v1080
        %v1084 = vsel %vm304, %v1078, %v1082
        %v1085 = vsel %vm304, %v1080, %v1076
        %v1086 = vsel %vm304, %v1082, %v1078
        %v1087 = vmul.f32 %v1085, %v312
        %v1088 = vmul.f32 %v1083, %v316
        %v1089 = vmul.f32 %v1086, %v312
        %v1090 = vmul.f32 %v1084, %v316
        %v1091 = vpack.c.bf16 %v1089, %v1087
        %v1092 = vpack.c.bf16 %v1090, %v1088
        %v1093 = vld [vmem:[#allocation8] sm:$0xf]
        %v1094 = vld [vmem:[#allocation8 + $0x4] sm:$0xf]
        %1095 = vrot.lane.b32.xlu0 %v1069, 16
        %v1096 = vpop.permute.xlu0 %1095
        %1097 = vrot.lane.b32.xlu0 %v1071, 16
        %v1098 = vpop.permute.xlu0 %1097
        %1099 = vrot.lane.b32.xlu0 %v1070, 16
        %v1100 = vpop.permute.xlu0 %1099
        %1101 = vrot.lane.b32.xlu0 %v1072, 16
        %v1102 = vpop.permute.xlu0 %1101
        %v1103 = vsel %vm333, %v1096, %v1100
        %v1104 = vsel %vm333, %v1098, %v1102
        %v1105 = vsel %vm333, %v1100, %v1096
        %v1106 = vsel %vm333, %v1102, %v1098
        %v1107 = vmul.f32 %v1105, %v341
        %v1108 = vmul.f32 %v1103, %v345
        %v1109 = vmul.f32 %v1106, %v341
        %v1110 = vmul.f32 %v1104, %v345
        %v1111 = vpack.c.bf16 %v1109, %v1107
        %v1112 = vpack.c.bf16 %v1110, %v1108
        %s1113 = scalar_lea.vmem [#allocation8], 8
        %v1114 = vld [vmem:[%s1113] sm:$0xf]
        %v1115 = vld [vmem:[%s1113 + $0x4] sm:$0xf]
        %v1118 = vunpack.c.l.b16 %v1114
        %v1119 = vunpack.c.l.b16 %v1115
        %v1120 = vpack.c.b16 %v1119, %v1118
        %v1122 = vsel %vm360, %v1120, 0
        %1124 = vmatprep.subr.bf16.mxu0 %v1112
        %1125 = vmatpush1.bf16.msra.mxu0 %v1111
        %1126 = vmatprep.subr.bf16.mxu0 0
        %1127 = vmatpush1.bf16.msra.mxu0 0
        %1128 = vmatprep.subr.bf16.mxu0 0
        %1129 = vmatpush1.bf16.msra.mxu0 0
        %1130 = vmatprep.subr.bf16.mxu0 0
        %1131 = vmatpush1.bf16.msra.mxu0 0
        %1132 = vmatprep.subr.bf16.mxu0 0
        %1133 = vmatpush1.bf16.msra.mxu0 0
        %1134 = vmatprep.subr.bf16.mxu0 0
        %1135 = vmatpush1.bf16.msra.mxu0 0
        %1136 = vmatprep.subr.bf16.mxu0 0
        %1137 = vmatpush1.bf16.msra.mxu0 0
        %1138 = vmatprep.subr.bf16.mxu0 0
        %1139 = vmatpush1.bf16.msra.mxu0 0
        %1140 = vmatprep.subr.bf16.mxu0 0
        %1141 = vmatpush1.bf16.msra.mxu0 0
        %1142 = vmatprep.subr.bf16.mxu0 0
        %1143 = vmatpush1.bf16.msra.mxu0 0
        %1144 = vmatprep.subr.bf16.mxu0 0
        %1145 = vmatpush1.bf16.msra.mxu0 0
        %1146 = vmatprep.subr.bf16.mxu0 0
        %1147 = vmatpush1.bf16.msra.mxu0 0
        %1148 = vmatprep.subr.bf16.mxu0 0
        %1149 = vmatpush1.bf16.msra.mxu0 0
        %1150 = vmatprep.subr.bf16.mxu0 0
        %1151 = vmatpush1.bf16.msra.mxu0 0
        %1152 = vmatprep.subr.bf16.mxu0 0
        %1153 = vmatpush1.bf16.msra.mxu0 0
        %1154 = vmatprep.subr.bf16.mxu0 0
        %1155 = vmatpush1.bf16.msra.mxu0 0
        %1156 = vmatprep.mubr.bf16.mxu0 0
        %1157 = vmatmul.mubr.bf16.gmra.mrb[0].mxu0 %v1122
        %v1158 = vpop.f32.mrb[0].mxu0
        %v1159 = vadd.f32 0.0, %v1158
        %v1160 = vpop.f32.mrb[0].mxu0
        %v1161 = vadd.f32 0.0, %v1160
        %v1162 = vpop.f32.mrb[0].mxu0
        %v1163 = vadd.f32 0.0, %v1162
        %v1164 = vpop.f32.mrb[0].mxu0
        %v1165 = vadd.f32 0.0, %v1164
        %1166 = vdwg.mxu0
        %v1169 = vunpack.c.l.b16 %v1093
        %v1170 = vunpack.c.l.b16 %v1094
        %v1171 = vpack.c.b16 %v1170, %v1169
        %v1173 = vsel %vm360, %v1171, 0
        %1175 = vmatprep.subr.bf16.mxu0 %v1092
        %1176 = vmatpush1.bf16.msra.mxu0 %v1091
        %1177 = vmatprep.subr.bf16.mxu0 0
        %1178 = vmatpush1.bf16.msra.mxu0 0
        %1179 = vmatprep.subr.bf16.mxu0 0
        %1180 = vmatpush1.bf16.msra.mxu0 0
        %1181 = vmatprep.subr.bf16.mxu0 0
        %1182 = vmatpush1.bf16.msra.mxu0 0
        %1183 = vmatprep.subr.bf16.mxu0 0
        %1184 = vmatpush1.bf16.msra.mxu0 0
        %1185 = vmatprep.subr.bf16.mxu0 0
        %1186 = vmatpush1.bf16.msra.mxu0 0
        %1187 = vmatprep.subr.bf16.mxu0 0
        %1188 = vmatpush1.bf16.msra.mxu0 0
        %1189 = vmatprep.subr.bf16.mxu0 0
        %1190 = vmatpush1.bf16.msra.mxu0 0
        %1191 = vmatprep.subr.bf16.mxu0 0
        %1192 = vmatpush1.bf16.msra.mxu0 0
        %1193 = vmatprep.subr.bf16.mxu0 0
        %1194 = vmatpush1.bf16.msra.mxu0 0
        %1195 = vmatprep.subr.bf16.mxu0 0
        %1196 = vmatpush1.bf16.msra.mxu0 0
        %1197 = vmatprep.subr.bf16.mxu0 0
        %1198 = vmatpush1.bf16.msra.mxu0 0
        %1199 = vmatprep.subr.bf16.mxu0 0
        %1200 = vmatpush1.bf16.msra.mxu0 0
        %1201 = vmatprep.subr.bf16.mxu0 0
        %1202 = vmatpush1.bf16.msra.mxu0 0
        %1203 = vmatprep.subr.bf16.mxu0 0
        %1204 = vmatpush1.bf16.msra.mxu0 0
        %1205 = vmatprep.subr.bf16.mxu0 0
        %1206 = vmatpush1.bf16.msra.mxu0 0
        %1207 = vmatprep.mubr.bf16.mxu0 0
        %1208 = vmatmul.mubr.bf16.gmra.mrb[0].mxu0 %v1173
        %v1209 = vpop.f32.mrb[0].mxu0
        %v1210 = vadd.f32 %v1159, %v1209
        %v1211 = vpop.f32.mrb[0].mxu0
        %v1212 = vadd.f32 %v1161, %v1211
        %v1213 = vpop.f32.mrb[0].mxu0
        %v1214 = vadd.f32 %v1163, %v1213
        %v1215 = vpop.f32.mrb[0].mxu0
        %v1216 = vadd.f32 %v1165, %v1215
        %1217 = vdwg.mxu0
        %1218 = vrot.lane.b32.xlu0 %v1069, 15
        %v1219 = vpop.permute.xlu0 %1218
        %1220 = vrot.lane.b32.xlu0 %v1071, 15
        %v1221 = vpop.permute.xlu0 %1220
        %1222 = vrot.lane.b32.xlu0 %v1070, 15
        %v1223 = vpop.permute.xlu0 %1222
        %1224 = vrot.lane.b32.xlu0 %v1072, 15
        %v1225 = vpop.permute.xlu0 %1224
        %v1226 = vsel %vm466, %v1219, %v1223
        %v1227 = vsel %vm466, %v1221, %v1225
        %v1228 = vsel %vm466, %v1223, %v1219
        %v1229 = vsel %vm466, %v1225, %v1221
        %v1230 = vmul.f32 %v1228, %v474
        %v1231 = vmul.f32 %v1226, %v478
        %v1232 = vmul.f32 %v1229, %v474
        %v1233 = vmul.f32 %v1227, %v478
        %v1234 = vpack.c.bf16 %v1232, %v1230
        %v1235 = vpack.c.bf16 %v1233, %v1231
        %s1236 = scalar_lea.vmem [#allocation8], 16
        %v1237 = vld [vmem:[%s1236] sm:$0xf]
        %v1238 = vld [vmem:[%s1236 + $0x4] sm:$0xf]
        %v1241 = vunpack.c.l.b16 %v1237
        %v1242 = vunpack.c.l.b16 %v1238
        %v1243 = vpack.c.b16 %v1242, %v1241
        %v1245 = vsel %vm360, %v1243, 0
        %1247 = vmatprep.subr.bf16.mxu0 %v1235
        %1248 = vmatpush1.bf16.msra.mxu0 %v1234
        %1249 = vmatprep.subr.bf16.mxu0 0
        %1250 = vmatpush1.bf16.msra.mxu0 0
        %1251 = vmatprep.subr.bf16.mxu0 0
        %1252 = vmatpush1.bf16.msra.mxu0 0
        %1253 = vmatprep.subr.bf16.mxu0 0
        %1254 = vmatpush1.bf16.msra.mxu0 0
        %1255 = vmatprep.subr.bf16.mxu0 0
        %1256 = vmatpush1.bf16.msra.mxu0 0
        %1257 = vmatprep.subr.bf16.mxu0 0
        %1258 = vmatpush1.bf16.msra.mxu0 0
        %1259 = vmatprep.subr.bf16.mxu0 0
        %1260 = vmatpush1.bf16.msra.mxu0 0
        %1261 = vmatprep.subr.bf16.mxu0 0
        %1262 = vmatpush1.bf16.msra.mxu0 0
        %1263 = vmatprep.subr.bf16.mxu0 0
        %1264 = vmatpush1.bf16.msra.mxu0 0
        %1265 = vmatprep.subr.bf16.mxu0 0
        %1266 = vmatpush1.bf16.msra.mxu0 0
        %1267 = vmatprep.subr.bf16.mxu0 0
        %1268 = vmatpush1.bf16.msra.mxu0 0
        %1269 = vmatprep.subr.bf16.mxu0 0
        %1270 = vmatpush1.bf16.msra.mxu0 0
        %1271 = vmatprep.subr.bf16.mxu0 0
        %1272 = vmatpush1.bf16.msra.mxu0 0
        %1273 = vmatprep.subr.bf16.mxu0 0
        %1274 = vmatpush1.bf16.msra.mxu0 0
        %1275 = vmatprep.subr.bf16.mxu0 0
        %1276 = vmatpush1.bf16.msra.mxu0 0
        %1277 = vmatprep.subr.bf16.mxu0 0
        %1278 = vmatpush1.bf16.msra.mxu0 0
        %1279 = vmatprep.mubr.bf16.mxu0 0
        %1280 = vmatmul.mubr.bf16.gmra.mrb[0].mxu0 %v1245
        %v1281 = vpop.f32.mrb[0].mxu0
        %v1282 = vadd.f32 0.0, %v1281
        %v1283 = vpop.f32.mrb[0].mxu0
        %v1284 = vadd.f32 0.0, %v1283
        %v1285 = vpop.f32.mrb[0].mxu0
        %v1286 = vadd.f32 0.0, %v1285
        %v1287 = vpop.f32.mrb[0].mxu0
        %v1288 = vadd.f32 0.0, %v1287
        %1289 = vdwg.mxu0
        %v1290 = vadd.f32 %v1210, %v1282
        %v1291 = vadd.f32 %v1212, %v1284
        %v1292 = vadd.f32 %v1214, %v1286
        %v1293 = vadd.f32 %v1216, %v1288
        %1294 = vrot.lane.b32.xlu0 %v1069, 1
        %v1295 = vpop.permute.xlu0 %1294
        %1296 = vrot.lane.b32.xlu0 %v1071, 1
        %v1297 = vpop.permute.xlu0 %1296
        %1298 = vrot.lane.b32.xlu0 %v1070, 1
        %v1299 = vpop.permute.xlu0 %1298
        %1300 = vrot.lane.b32.xlu0 %v1072, 1
        %v1301 = vpop.permute.xlu0 %1300
        %v1302 = vsel %vm551, %v1295, %v1299
        %v1303 = vsel %vm551, %v1297, %v1301
        %v1304 = vsel %vm551, %v1299, %v1295
        %v1305 = vsel %vm551, %v1301, %v1297
        %v1306 = vmul.f32 %v1304, %v559
        %v1307 = vmul.f32 %v1302, %v563
        %v1308 = vmul.f32 %v1305, %v559
        %v1309 = vmul.f32 %v1303, %v563
        %v1310 = vpack.c.bf16 %v1308, %v1306
        %v1311 = vpack.c.bf16 %v1309, %v1307
        %s1312 = scalar_lea.vmem [#allocation8], 24
        %v1313 = vld [vmem:[%s1312] sm:$0xf]
        %v1314 = vld [vmem:[%s1312 + $0x4] sm:$0xf]
        %v1317 = vunpack.c.l.b16 %v1313
        %v1318 = vunpack.c.l.b16 %v1314
        %v1319 = vpack.c.b16 %v1318, %v1317
        %v1321 = vsel %vm360, %v1319, 0
        %1323 = vmatprep.subr.bf16.mxu0 %v1311
        %1324 = vmatpush1.bf16.msra.mxu0 %v1310
        %1325 = vmatprep.subr.bf16.mxu0 0
        %1326 = vmatpush1.bf16.msra.mxu0 0
        %1327 = vmatprep.subr.bf16.mxu0 0
        %1328 = vmatpush1.bf16.msra.mxu0 0
        %1329 = vmatprep.subr.bf16.mxu0 0
        %1330 = vmatpush1.bf16.msra.mxu0 0
        %1331 = vmatprep.subr.bf16.mxu0 0
        %1332 = vmatpush1.bf16.msra.mxu0 0
        %1333 = vmatprep.subr.bf16.mxu0 0
        %1334 = vmatpush1.bf16.msra.mxu0 0
        %1335 = vmatprep.subr.bf16.mxu0 0
        %1336 = vmatpush1.bf16.msra.mxu0 0
        %1337 = vmatprep.subr.bf16.mxu0 0
        %1338 = vmatpush1.bf16.msra.mxu0 0
        %1339 = vmatprep.subr.bf16.mxu0 0
        %1340 = vmatpush1.bf16.msra.mxu0 0
        %1341 = vmatprep.subr.bf16.mxu0 0
        %1342 = vmatpush1.bf16.msra.mxu0 0
        %1343 = vmatprep.subr.bf16.mxu0 0
        %1344 = vmatpush1.bf16.msra.mxu0 0
        %1345 = vmatprep.subr.bf16.mxu0 0
        %1346 = vmatpush1.bf16.msra.mxu0 0
        %1347 = vmatprep.subr.bf16.mxu0 0
        %1348 = vmatpush1.bf16.msra.mxu0 0
        %1349 = vmatprep.subr.bf16.mxu0 0
        %1350 = vmatpush1.bf16.msra.mxu0 0
        %1351 = vmatprep.subr.bf16.mxu0 0
        %1352 = vmatpush1.bf16.msra.mxu0 0
        %1353 = vmatprep.subr.bf16.mxu0 0
        %1354 = vmatpush1.bf16.msra.mxu0 0
        %1355 = vmatprep.mubr.bf16.mxu0 0
        %1356 = vmatmul.mubr.bf16.gmra.mrb[0].mxu0 %v1321
        %v1357 = vpop.f32.mrb[0].mxu0
        %v1358 = vadd.f32 0.0, %v1357
        %v1359 = vpop.f32.mrb[0].mxu0
        %v1360 = vadd.f32 0.0, %v1359
        %v1361 = vpop.f32.mrb[0].mxu0
        %v1362 = vadd.f32 0.0, %v1361
        %v1363 = vpop.f32.mrb[0].mxu0
        %v1364 = vadd.f32 0.0, %v1363
        %1365 = vdwg.mxu0
        %v1366 = vadd.f32 %v1290, %v1358
        %v1367 = vadd.f32 %v1291, %v1360
        %v1368 = vadd.f32 %v1292, %v1362
        %v1369 = vadd.f32 %v1293, %v1364
        %s1370 = scalar_lea.vmem [#allocation8], 32
        %v1371 = vld [vmem:[%s1370] sm:$0xf]
        %v1372 = vld [vmem:[%s1370 + $0x4] sm:$0xf]
        %v1375 = vunpack.c.l.b16 %v1371
        %v1376 = vunpack.c.l.b16 %v1372
        %v1377 = vpack.c.b16 %v1376, %v1375
        %v1379 = vsel %vm360, %v1377, 0
        %1381 = vmatprep.subr.bf16.mxu0 %v1074
        %1382 = vmatpush1.bf16.msra.mxu0 %v1073
        %1383 = vmatprep.subr.bf16.mxu0 0
        %1384 = vmatpush1.bf16.msra.mxu0 0
        %1385 = vmatprep.subr.bf16.mxu0 0
        %1386 = vmatpush1.bf16.msra.mxu0 0
        %1387 = vmatprep.subr.bf16.mxu0 0
        %1388 = vmatpush1.bf16.msra.mxu0 0
        %1389 = vmatprep.subr.bf16.mxu0 0
        %1390 = vmatpush1.bf16.msra.mxu0 0
        %1391 = vmatprep.subr.bf16.mxu0 0
        %1392 = vmatpush1.bf16.msra.mxu0 0
        %1393 = vmatprep.subr.bf16.mxu0 0
        %1394 = vmatpush1.bf16.msra.mxu0 0
        %1395 = vmatprep.subr.bf16.mxu0 0
        %1396 = vmatpush1.bf16.msra.mxu0 0
        %1397 = vmatprep.subr.bf16.mxu0 0
        %1398 = vmatpush1.bf16.msra.mxu0 0
        %1399 = vmatprep.subr.bf16.mxu0 0
        %1400 = vmatpush1.bf16.msra.mxu0 0
        %1401 = vmatprep.subr.bf16.mxu0 0
        %1402 = vmatpush1.bf16.msra.mxu0 0
        %1403 = vmatprep.subr.bf16.mxu0 0
        %1404 = vmatpush1.bf16.msra.mxu0 0
        %1405 = vmatprep.subr.bf16.mxu0 0
        %1406 = vmatpush1.bf16.msra.mxu0 0
        %1407 = vmatprep.subr.bf16.mxu0 0
        %1408 = vmatpush1.bf16.msra.mxu0 0
        %1409 = vmatprep.subr.bf16.mxu0 0
        %1410 = vmatpush1.bf16.msra.mxu0 0
        %1411 = vmatprep.subr.bf16.mxu0 0
        %1412 = vmatpush1.bf16.msra.mxu0 0
        %1413 = vmatprep.mubr.bf16.mxu0 0
        %1414 = vmatmul.mubr.bf16.gmra.mrb[0].mxu0 %v1379
        %v1415 = vpop.f32.mrb[0].mxu0
        %v1416 = vadd.f32 0.0, %v1415
        %v1417 = vpop.f32.mrb[0].mxu0
        %v1418 = vadd.f32 0.0, %v1417
        %v1419 = vpop.f32.mrb[0].mxu0
        %v1420 = vadd.f32 0.0, %v1419
        %v1421 = vpop.f32.mrb[0].mxu0
        %v1422 = vadd.f32 0.0, %v1421
        %1423 = vdwg.mxu0
        %v1424 = vadd.f32 %v1366, %v1416
        %v1425 = vadd.f32 %v1367, %v1418
        %v1426 = vadd.f32 %v1368, %v1420
        %v1427 = vadd.f32 %v1369, %v1422
        %1428 = vrot.lane.b32.xlu0 %v1069, 127
        %v1429 = vpop.permute.xlu0 %1428
        %1430 = vrot.lane.b32.xlu0 %v1071, 127
        %v1431 = vpop.permute.xlu0 %1430
        %1432 = vrot.lane.b32.xlu0 %v1070, 127
        %v1433 = vpop.permute.xlu0 %1432
        %1434 = vrot.lane.b32.xlu0 %v1072, 127
        %v1435 = vpop.permute.xlu0 %1434
        %v1436 = vsel %vm694, %v1429, %v1433
        %v1437 = vsel %vm694, %v1431, %v1435
        %v1438 = vsel %vm694, %v1433, %v1429
        %v1439 = vsel %vm694, %v1435, %v1431
        %v1440 = vmul.f32 %v1436, %v702
        %v1441 = vmul.f32 %v1438, %v706
        %v1442 = vmul.f32 %v1437, %v702
        %v1443 = vmul.f32 %v1439, %v706
        %v1444 = vpack.c.bf16 %v1442, %v1440
        %v1445 = vpack.c.bf16 %v1443, %v1441
        %s1446 = scalar_lea.vmem [#allocation8], 40
        %v1447 = vld [vmem:[%s1446] sm:$0xf]
        %v1448 = vld [vmem:[%s1446 + $0x4] sm:$0xf]
        %v1451 = vunpack.c.l.b16 %v1447
        %v1452 = vunpack.c.l.b16 %v1448
        %v1453 = vpack.c.b16 %v1452, %v1451
        %v1455 = vsel %vm360, %v1453, 0
        %1457 = vmatprep.subr.bf16.mxu0 %v1445
        %1458 = vmatpush1.bf16.msra.mxu0 %v1444
        %1459 = vmatprep.subr.bf16.mxu0 0
        %1460 = vmatpush1.bf16.msra.mxu0 0
        %1461 = vmatprep.subr.bf16.mxu0 0
        %1462 = vmatpush1.bf16.msra.mxu0 0
        %1463 = vmatprep.subr.bf16.mxu0 0
        %1464 = vmatpush1.bf16.msra.mxu0 0
        %1465 = vmatprep.subr.bf16.mxu0 0
        %1466 = vmatpush1.bf16.msra.mxu0 0
        %1467 = vmatprep.subr.bf16.mxu0 0
        %1468 = vmatpush1.bf16.msra.mxu0 0
        %1469 = vmatprep.subr.bf16.mxu0 0
        %1470 = vmatpush1.bf16.msra.mxu0 0
        %1471 = vmatprep.subr.bf16.mxu0 0
        %1472 = vmatpush1.bf16.msra.mxu0 0
        %1473 = vmatprep.subr.bf16.mxu0 0
        %1474 = vmatpush1.bf16.msra.mxu0 0
        %1475 = vmatprep.subr.bf16.mxu0 0
        %1476 = vmatpush1.bf16.msra.mxu0 0
        %1477 = vmatprep.subr.bf16.mxu0 0
        %1478 = vmatpush1.bf16.msra.mxu0 0
        %1479 = vmatprep.subr.bf16.mxu0 0
        %1480 = vmatpush1.bf16.msra.mxu0 0
        %1481 = vmatprep.subr.bf16.mxu0 0
        %1482 = vmatpush1.bf16.msra.mxu0 0
        %1483 = vmatprep.subr.bf16.mxu0 0
        %1484 = vmatpush1.bf16.msra.mxu0 0
        %1485 = vmatprep.subr.bf16.mxu0 0
        %1486 = vmatpush1.bf16.msra.mxu0 0
        %1487 = vmatprep.subr.bf16.mxu0 0
        %1488 = vmatpush1.bf16.msra.mxu0 0
        %1489 = vmatprep.mubr.bf16.mxu0 0
        %1490 = vmatmul.mubr.bf16.gmra.mrb[0].mxu0 %v1455
        %v1491 = vpop.f32.mrb[0].mxu0
        %v1492 = vadd.f32 0.0, %v1491
        %v1493 = vpop.f32.mrb[0].mxu0
        %v1494 = vadd.f32 0.0, %v1493
        %v1495 = vpop.f32.mrb[0].mxu0
        %v1496 = vadd.f32 0.0, %v1495
        %v1497 = vpop.f32.mrb[0].mxu0
        %v1498 = vadd.f32 0.0, %v1497
        %1499 = vdwg.mxu0
        %v1500 = vadd.f32 %v1424, %v1492
        %v1501 = vadd.f32 %v1425, %v1494
        %v1502 = vadd.f32 %v1426, %v1496
        %v1503 = vadd.f32 %v1427, %v1498
        %1504 = vrot.lane.b32.xlu0 %v1069, 113
        %v1505 = vpop.permute.xlu0 %1504
        %1506 = vrot.lane.b32.xlu0 %v1071, 113
        %v1507 = vpop.permute.xlu0 %1506
        %1508 = vrot.lane.b32.xlu0 %v1070, 113
        %v1509 = vpop.permute.xlu0 %1508
        %1510 = vrot.lane.b32.xlu0 %v1072, 113
        %v1511 = vpop.permute.xlu0 %1510
        %v1512 = vsel %vm779, %v1505, %v1509
        %v1513 = vsel %vm779, %v1507, %v1511
        %v1514 = vsel %vm779, %v1509, %v1505
        %v1515 = vsel %vm779, %v1511, %v1507
        %v1516 = vmul.f32 %v1512, %v787
        %v1517 = vmul.f32 %v1514, %v791
        %v1518 = vmul.f32 %v1513, %v787
        %v1519 = vmul.f32 %v1515, %v791
        %v1520 = vpack.c.bf16 %v1518, %v1516
        %v1521 = vpack.c.bf16 %v1519, %v1517
        %s1522 = scalar_lea.vmem [#allocation8], 48
        %v1523 = vld [vmem:[%s1522] sm:$0xf]
        %v1524 = vld [vmem:[%s1522 + $0x4] sm:$0xf]
        %v1527 = vunpack.c.l.b16 %v1523
        %v1528 = vunpack.c.l.b16 %v1524
        %v1529 = vpack.c.b16 %v1528, %v1527
        %v1531 = vsel %vm360, %v1529, 0
        %1533 = vmatprep.subr.bf16.mxu0 %v1521
        %1534 = vmatpush1.bf16.msra.mxu0 %v1520
        %1535 = vmatprep.subr.bf16.mxu0 0
        %1536 = vmatpush1.bf16.msra.mxu0 0
        %1537 = vmatprep.subr.bf16.mxu0 0
        %1538 = vmatpush1.bf16.msra.mxu0 0
        %1539 = vmatprep.subr.bf16.mxu0 0
        %1540 = vmatpush1.bf16.msra.mxu0 0
        %1541 = vmatprep.subr.bf16.mxu0 0
        %1542 = vmatpush1.bf16.msra.mxu0 0
        %1543 = vmatprep.subr.bf16.mxu0 0
        %1544 = vmatpush1.bf16.msra.mxu0 0
        %1545 = vmatprep.subr.bf16.mxu0 0
        %1546 = vmatpush1.bf16.msra.mxu0 0
        %1547 = vmatprep.subr.bf16.mxu0 0
        %1548 = vmatpush1.bf16.msra.mxu0 0
        %1549 = vmatprep.subr.bf16.mxu0 0
        %1550 = vmatpush1.bf16.msra.mxu0 0
        %1551 = vmatprep.subr.bf16.mxu0 0
        %1552 = vmatpush1.bf16.msra.mxu0 0
        %1553 = vmatprep.subr.bf16.mxu0 0
        %1554 = vmatpush1.bf16.msra.mxu0 0
        %1555 = vmatprep.subr.bf16.mxu0 0
        %1556 = vmatpush1.bf16.msra.mxu0 0
        %1557 = vmatprep.subr.bf16.mxu0 0
        %1558 = vmatpush1.bf16.msra.mxu0 0
        %1559 = vmatprep.subr.bf16.mxu0 0
        %1560 = vmatpush1.bf16.msra.mxu0 0
        %1561 = vmatprep.subr.bf16.mxu0 0
        %1562 = vmatpush1.bf16.msra.mxu0 0
        %1563 = vmatprep.subr.bf16.mxu0 0
        %1564 = vmatpush1.bf16.msra.mxu0 0
        %1565 = vmatprep.mubr.bf16.mxu0 0
        %1566 = vmatmul.mubr.bf16.gmra.mrb[0].mxu0 %v1531
        %v1567 = vpop.f32.mrb[0].mxu0
        %v1568 = vadd.f32 0.0, %v1567
        %v1569 = vpop.f32.mrb[0].mxu0
        %v1570 = vadd.f32 0.0, %v1569
        %v1571 = vpop.f32.mrb[0].mxu0
        %v1572 = vadd.f32 0.0, %v1571
        %v1573 = vpop.f32.mrb[0].mxu0
        %v1574 = vadd.f32 0.0, %v1573
        %1575 = vdwg.mxu0
        %v1576 = vadd.f32 %v1500, %v1568
        %v1577 = vadd.f32 %v1501, %v1570
        %v1578 = vadd.f32 %v1502, %v1572
        %v1579 = vadd.f32 %v1503, %v1574
        %1580 = vrot.lane.b32.xlu0 %v1069, 112
        %v1581 = vpop.permute.xlu0 %1580
        %1582 = vrot.lane.b32.xlu0 %v1071, 112
        %v1583 = vpop.permute.xlu0 %1582
        %1584 = vrot.lane.b32.xlu0 %v1070, 112
        %v1585 = vpop.permute.xlu0 %1584
        %1586 = vrot.lane.b32.xlu0 %v1072, 112
        %v1587 = vpop.permute.xlu0 %1586
        %v1588 = vsel %vm864, %v1581, %v1585
        %v1589 = vsel %vm864, %v1583, %v1587
        %v1590 = vsel %vm864, %v1585, %v1581
        %v1591 = vsel %vm864, %v1587, %v1583
        %v1592 = vmul.f32 %v1588, %v872
        %v1593 = vmul.f32 %v1590, %v876
        %v1594 = vmul.f32 %v1589, %v872
        %v1595 = vmul.f32 %v1591, %v876
        %v1596 = vpack.c.bf16 %v1594, %v1592
        %v1597 = vpack.c.bf16 %v1595, %v1593
        %s1598 = scalar_lea.vmem [#allocation8], 56
        %v1599 = vld [vmem:[%s1598] sm:$0xf]
        %v1600 = vld [vmem:[%s1598 + $0x4] sm:$0xf]
        %v1603 = vunpack.c.l.b16 %v1599
        %v1604 = vunpack.c.l.b16 %v1600
        %v1605 = vpack.c.b16 %v1604, %v1603
        %v1607 = vsel %vm360, %v1605, 0
        %1609 = vmatprep.subr.bf16.mxu0 %v1597
        %1610 = vmatpush1.bf16.msra.mxu0 %v1596
        %1611 = vmatprep.subr.bf16.mxu0 0
        %1612 = vmatpush1.bf16.msra.mxu0 0
        %1613 = vmatprep.subr.bf16.mxu0 0
        %1614 = vmatpush1.bf16.msra.mxu0 0
        %1615 = vmatprep.subr.bf16.mxu0 0
        %1616 = vmatpush1.bf16.msra.mxu0 0
        %1617 = vmatprep.subr.bf16.mxu0 0
        %1618 = vmatpush1.bf16.msra.mxu0 0
        %1619 = vmatprep.subr.bf16.mxu0 0
        %1620 = vmatpush1.bf16.msra.mxu0 0
        %1621 = vmatprep.subr.bf16.mxu0 0
        %1622 = vmatpush1.bf16.msra.mxu0 0
        %1623 = vmatprep.subr.bf16.mxu0 0
        %1624 = vmatpush1.bf16.msra.mxu0 0
        %1625 = vmatprep.subr.bf16.mxu0 0
        %1626 = vmatpush1.bf16.msra.mxu0 0
        %1627 = vmatprep.subr.bf16.mxu0 0
        %1628 = vmatpush1.bf16.msra.mxu0 0
        %1629 = vmatprep.subr.bf16.mxu0 0
        %1630 = vmatpush1.bf16.msra.mxu0 0
        %1631 = vmatprep.subr.bf16.mxu0 0
        %1632 = vmatpush1.bf16.msra.mxu0 0
        %1633 = vmatprep.subr.bf16.mxu0 0
        %1634 = vmatpush1.bf16.msra.mxu0 0
        %1635 = vmatprep.subr.bf16.mxu0 0
        %1636 = vmatpush1.bf16.msra.mxu0 0
        %1637 = vmatprep.subr.bf16.mxu0 0
        %1638 = vmatpush1.bf16.msra.mxu0 0
        %1639 = vmatprep.subr.bf16.mxu0 0
        %1640 = vmatpush1.bf16.msra.mxu0 0
        %1641 = vmatprep.mubr.bf16.mxu0 0
        %1642 = vmatmul.mubr.bf16.gmra.mrb[0].mxu0 %v1607
        %v1643 = vpop.f32.mrb[0].mxu0
        %v1644 = vadd.f32 0.0, %v1643
        %v1645 = vpop.f32.mrb[0].mxu0
        %v1646 = vadd.f32 0.0, %v1645
        %v1647 = vpop.f32.mrb[0].mxu0
        %v1648 = vadd.f32 0.0, %v1647
        %v1649 = vpop.f32.mrb[0].mxu0
        %v1650 = vadd.f32 0.0, %v1649
        %1651 = vdwg.mxu0
        %v1652 = vadd.f32 %v1576, %v1644
        %v1653 = vadd.f32 %v1577, %v1646
        %v1654 = vadd.f32 %v1578, %v1648
        %v1655 = vadd.f32 %v1579, %v1650
        %1656 = vrot.lane.b32.xlu0 %v1069, 111
        %v1657 = vpop.permute.xlu0 %1656
        %1658 = vrot.lane.b32.xlu0 %v1071, 111
        %v1659 = vpop.permute.xlu0 %1658
        %1660 = vrot.lane.b32.xlu0 %v1070, 111
        %v1661 = vpop.permute.xlu0 %1660
        %1662 = vrot.lane.b32.xlu0 %v1072, 111
        %v1663 = vpop.permute.xlu0 %1662
        %v1664 = vsel %vm949, %v1657, %v1661
        %v1665 = vsel %vm949, %v1659, %v1663
        %v1666 = vsel %vm949, %v1661, %v1657
        %v1667 = vsel %vm949, %v1663, %v1659
        %v1668 = vmul.f32 %v1664, %v957
        %v1669 = vmul.f32 %v1666, %v961
        %v1670 = vmul.f32 %v1665, %v957
        %v1671 = vmul.f32 %v1667, %v961
        %v1672 = vpack.c.bf16 %v1670, %v1668
        %v1673 = vpack.c.bf16 %v1671, %v1669
        %s1674 = scalar_lea.vmem [#allocation8], 64
        %v1675 = vld [vmem:[%s1674] sm:$0xf]
        %v1676 = vld [vmem:[%s1674 + $0x4] sm:$0xf]
        %v1679 = vunpack.c.l.b16 %v1675
        %v1680 = vunpack.c.l.b16 %v1676
        %v1681 = vpack.c.b16 %v1680, %v1679
        %v1683 = vsel %vm360, %v1681, 0
        %1685 = vmatprep.subr.bf16.mxu0 %v1673
        %1686 = vmatpush1.bf16.msra.mxu0 %v1672
        %1687 = vmatprep.subr.bf16.mxu0 0
        %1688 = vmatpush1.bf16.msra.mxu0 0
        %1689 = vmatprep.subr.bf16.mxu0 0
        %1690 = vmatpush1.bf16.msra.mxu0 0
        %1691 = vmatprep.subr.bf16.mxu0 0
        %1692 = vmatpush1.bf16.msra.mxu0 0
        %1693 = vmatprep.subr.bf16.mxu0 0
        %1694 = vmatpush1.bf16.msra.mxu0 0
        %1695 = vmatprep.subr.bf16.mxu0 0
        %1696 = vmatpush1.bf16.msra.mxu0 0
        %1697 = vmatprep.subr.bf16.mxu0 0
        %1698 = vmatpush1.bf16.msra.mxu0 0
        %1699 = vmatprep.subr.bf16.mxu0 0
        %1700 = vmatpush1.bf16.msra.mxu0 0
        %1701 = vmatprep.subr.bf16.mxu0 0
        %1702 = vmatpush1.bf16.msra.mxu0 0
        %1703 = vmatprep.subr.bf16.mxu0 0
        %1704 = vmatpush1.bf16.msra.mxu0 0
        %1705 = vmatprep.subr.bf16.mxu0 0
        %1706 = vmatpush1.bf16.msra.mxu0 0
        %1707 = vmatprep.subr.bf16.mxu0 0
        %1708 = vmatpush1.bf16.msra.mxu0 0
        %1709 = vmatprep.subr.bf16.mxu0 0
        %1710 = vmatpush1.bf16.msra.mxu0 0
        %1711 = vmatprep.subr.bf16.mxu0 0
        %1712 = vmatpush1.bf16.msra.mxu0 0
        %1713 = vmatprep.subr.bf16.mxu0 0
        %1714 = vmatpush1.bf16.msra.mxu0 0
        %1715 = vmatprep.subr.bf16.mxu0 0
        %1716 = vmatpush1.bf16.msra.mxu0 0
        %1717 = vmatprep.mubr.bf16.mxu0 0
        %1718 = vmatmul.mubr.bf16.gmra.mrb[0].mxu0 %v1683
        %v1719 = vpop.f32.mrb[0].mxu0
        %v1720 = vadd.f32 0.0, %v1719
        %v1721 = vpop.f32.mrb[0].mxu0
        %v1722 = vadd.f32 0.0, %v1721
        %v1723 = vpop.f32.mrb[0].mxu0
        %v1724 = vadd.f32 0.0, %v1723
        %v1725 = vpop.f32.mrb[0].mxu0
        %v1726 = vadd.f32 0.0, %v1725
        %1727 = vdwg.mxu0
        %v1728 = vadd.f32 %v1652, %v1720
        %v1729 = vadd.f32 %v1653, %v1722
        %v1730 = vadd.f32 %v1654, %v1724
        %v1731 = vadd.f32 %v1655, %v1726
        %v1732 = vadd.f32 %v1728, %v1729
        %1733 = vadd.xlane.f32.xlu0 %v1732
        %v1734 = vpop.xlane.xlu0 %1733
        %v1735 = vadd.f32 %v1730, %v1731
        %1736 = vadd.xlane.f32.xlu0 %v1735
        %v1737 = vpop.xlane.xlu0 %1736
        %v1738 = vmul.f32 %v1734, %v1032
        %v1739 = vmul.f32 %v1737, %v1032
        %v1740 = vmul.f32 %v1728, %v1728
        %v1741 = vmul.f32 %v1729, %v1729
        %v1742 = vmul.f32 %v1730, %v1730
        %v1743 = vmul.f32 %v1731, %v1731
        %v1744 = vadd.f32 %v1740, %v1741
        %1745 = vadd.xlane.f32.xlu0 %v1744
        %v1746 = vpop.xlane.xlu0 %1745
        %v1747 = vadd.f32 %v1742, %v1743
        %1748 = vadd.xlane.f32.xlu0 %v1747
        %v1749 = vpop.xlane.xlu0 %1748
        %v1750 = vmul.f32 %v1746, %v1032
        %v1751 = vmul.f32 %v1749, %v1032
        %v1752 = vmul.f32 %v1738, %v1738
        %v1753 = vmul.f32 %v1739, %v1739
        %v1754 = vsub.f32 %v1750, %v1752
        %v1755 = vsub.f32 %v1751, %v1753
        %v1756 = vmax.f32 %v1754, 0.0
        %v1757 = vmax.f32 %v1755, 0.0
        %v1758 = vsub.f32 %v1728, %v1738
        %v1759 = vsub.f32 %v1729, %v1738
        %v1760 = vsub.f32 %v1730, %v1739
        %v1761 = vsub.f32 %v1731, %v1739
        %v1762 = vadd.f32 %v1756, 1e-05
        %v1763 = vadd.f32 %v1757, 1e-05
        %v1764 = vrsqrt.pop %v1762
        %v1765 = vrsqrt.pop %v1763
        %v1766 = vmul.f32 %v1758, %v1764
        %v1767 = vmul.f32 %v1759, %v1764
        %v1768 = vmul.f32 %v1760, %v1765
        %v1769 = vmul.f32 %v1761, %v1765
        %v1770 = vld [vmem:[%s4] sm:$0xf]
        %v1771 = vld [vmem:[%s4 + $0x4] sm:$0xf]
        %v1774 = vunpack.c.l.b16 %v1770
        %v1775 = vunpack.c.l.b16 %v1771
        %v1776 = vpack.c.b16 %v1775, %v1774
        %v1778 = vsel %vm360, %v1776, 0
        %1780 = vmatprep.subr.bf16.mxu0 %v293
        %1781 = vmatpush1.bf16.msra.mxu0 %v292
        %1782 = vmatprep.subr.bf16.mxu0 0
        %1783 = vmatpush1.bf16.msra.mxu0 0
        %1784 = vmatprep.subr.bf16.mxu0 0
        %1785 = vmatpush1.bf16.msra.mxu0 0
        %1786 = vmatprep.subr.bf16.mxu0 0
        %1787 = vmatpush1.bf16.msra.mxu0 0
        %1788 = vmatprep.subr.bf16.mxu0 0
        %1789 = vmatpush1.bf16.msra.mxu0 0
        %1790 = vmatprep.subr.bf16.mxu0 0
        %1791 = vmatpush1.bf16.msra.mxu0 0
        %1792 = vmatprep.subr.bf16.mxu0 0
        %1793 = vmatpush1.bf16.msra.mxu0 0
        %1794 = vmatprep.subr.bf16.mxu0 0
        %1795 = vmatpush1.bf16.msra.mxu0 0
        %1796 = vmatprep.subr.bf16.mxu0 0
        %1797 = vmatpush1.bf16.msra.mxu0 0
        %1798 = vmatprep.subr.bf16.mxu0 0
        %1799 = vmatpush1.bf16.msra.mxu0 0
        %1800 = vmatprep.subr.bf16.mxu0 0
        %1801 = vmatpush1.bf16.msra.mxu0 0
        %1802 = vmatprep.subr.bf16.mxu0 0
        %1803 = vmatpush1.bf16.msra.mxu0 0
        %1804 = vmatprep.subr.bf16.mxu0 0
        %1805 = vmatpush1.bf16.msra.mxu0 0
        %1806 = vmatprep.subr.bf16.mxu0 0
        %1807 = vmatpush1.bf16.msra.mxu0 0
        %1808 = vmatprep.subr.bf16.mxu0 0
        %1809 = vmatpush1.bf16.msra.mxu0 0
        %1810 = vmatprep.subr.bf16.mxu0 0
        %1811 = vmatpush1.bf16.msra.mxu0 0
        %1812 = vmatprep.mubr.bf16.mxu0 0
        %1813 = vmatmul.mubr.bf16.gmra.mrb[0].mxu0 %v1778
        %v1814 = vpop.f32.mrb[0].mxu0
        %v1815 = vadd.f32 0.0, %v1814
        %v1816 = vpop.f32.mrb[0].mxu0
        %v1817 = vadd.f32 0.0, %v1816
        %v1818 = vpop.f32.mrb[0].mxu0
        %v1819 = vadd.f32 0.0, %v1818
        %v1820 = vpop.f32.mrb[0].mxu0
        %v1821 = vadd.f32 0.0, %v1820
        %1822 = vdwg.mxu0
        %v1823 = vadd.f32 %v1815, %v1817
        %1824 = vadd.xlane.f32.xlu0 %v1823
        %v1825 = vpop.xlane.xlu0 %1824
        %v1826 = vadd.f32 %v1819, %v1821
        %1827 = vadd.xlane.f32.xlu0 %v1826
        %v1828 = vpop.xlane.xlu0 %1827
        %v1829 = vmul.f32 %v1825, %v1032
        %v1830 = vmul.f32 %v1828, %v1032
        %v1831 = vmul.f32 %v1815, %v1815
        %v1832 = vmul.f32 %v1817, %v1817
        %v1833 = vmul.f32 %v1819, %v1819
        %v1834 = vmul.f32 %v1821, %v1821
        %v1835 = vadd.f32 %v1831, %v1832
        %1836 = vadd.xlane.f32.xlu0 %v1835
        %v1837 = vpop.xlane.xlu0 %1836
        %v1838 = vadd.f32 %v1833, %v1834
        %1839 = vadd.xlane.f32.xlu0 %v1838
        %v1840 = vpop.xlane.xlu0 %1839
        %v1841 = vmul.f32 %v1837, %v1032
        %v1842 = vmul.f32 %v1840, %v1032
        %v1843 = vmul.f32 %v1829, %v1829
        %v1844 = vmul.f32 %v1830, %v1830
        %v1845 = vsub.f32 %v1841, %v1843
        %v1846 = vsub.f32 %v1842, %v1844
        %v1847 = vmax.f32 %v1845, 0.0
        %v1848 = vmax.f32 %v1846, 0.0
        %v1849 = vsub.f32 %v1815, %v1829
        %v1850 = vsub.f32 %v1817, %v1829
        %v1851 = vsub.f32 %v1819, %v1830
        %v1852 = vsub.f32 %v1821, %v1830
        %v1853 = vadd.f32 %v1847, 1e-05
        %v1854 = vadd.f32 %v1848, 1e-05
        %v1855 = vrsqrt.pop %v1853
        %v1856 = vrsqrt.pop %v1854
        %v1857 = vmul.f32 %v1849, %v1855
        %v1858 = vmul.f32 %v1850, %v1855
        %v1859 = vmul.f32 %v1851, %v1856
        %v1860 = vmul.f32 %v1852, %v1856
        %v1861 = vadd.f32 %v1857, %v1766
        %v1862 = vadd.f32 %v1858, %v1767
        %v1863 = vadd.f32 %v1859, %v1768
        %v1864 = vadd.f32 %v1860, %v1769
        %v1865 = vmul.f32 %v1861, 0.2
        %v1866 = vmul.f32 %v1862, 0.2
        %v1867 = vmul.f32 %v1863, 0.2
        %v1868 = vmul.f32 %v1864, 0.2
        %v1869 = vmax.f32 %v1861, %v1865
        %v1870 = vmax.f32 %v1862, %v1866
        %v1871 = vmax.f32 %v1863, %v1867
        %v1872 = vmax.f32 %v1864, %v1868
        %1873 = vst [vmem:[%s284] sm:$0xff] %v1869
        %1874 = vst [vmem:[%s284 + $0x8] sm:$0xff] %v1870
        %1875 = vst [vmem:[%s284 + $0x10] sm:$0xff] %v1871
        %1876 = vst [vmem:[%s284 + $0x18] sm:$0xff] %v1872
        %s1877 = sand.u32 %s142, 1
        %s1878 = scalar_lea.sflag [#allocation4], %s1877
        %s1879 = sand.u32 %s142, 1
        %s1880 = smul.addr %s1879, 32
        %s1881 = scalar_lea.vmem [#allocation10], %s1880
        // Predicated region
        $region57: #{tpu_custom_call.1} parent=39 // pred_check
          %p1882 = pneg %p152
        $region58: #{tpu_custom_call.1} parent=39 // pred_check_branch
          %1884 = sbr.rel (%p1882) target = $region60
        $region59: #{tpu_custom_call.1} parent=39 // pred_region
          %s1886 = ssub.s32 512, 512
          %1887 = vsyncadd %s1878, %s1886
          %s1888 = smul.addr %s24, 4
          %s1889 = smul.addr %s1888, 128
          %s1890 = scalar_lea.hbm %s5, %s1889
          %s1891 = sshll.u32 %s1881, 4
          %s1892 = int_to_ptr.vmem [resolvable:$true] %s1891
          %1897 = dma.vmem_to_hbm [thread:$0]  %s1892, 512, %s1890, %s1878, 256, 256, 16
        $region60: #{tpu_custom_call.1} parent=39 // pred_fallthru
          _
      $region40: #{tpu_custom_call.1} parent=5 // pred_fallthru
        _
      %p1898 = scmp.le.s32.totalorder 2, %s19
      // Predicated region
      $region61: #{tpu_custom_call.1} parent=5 // pred_check
        %p1899 = pneg %p1898
      $region62: #{tpu_custom_call.1} parent=5 // pred_check_branch
        %1901 = sbr.rel (%p1899) target = $region64
      $region63: #{tpu_custom_call.1} parent=5 // pred_region
        %s1902 = ssub.s32 %s19, 2
        // Predicated region
        $region65: #{tpu_custom_call.1} parent=63 // pred_check
          %p1903 = pneg %p158
        $region66: #{tpu_custom_call.1} parent=63 // pred_check_branch
          %1905 = sbr.rel (%p1903) target = $region68
        $region67: #{tpu_custom_call.1} parent=63 // pred_region
          %s1906 = sand.u32 %s143, 1
          %s1907 = scalar_lea.sflag [#allocation4], %s1906
          %s1908 = sand.u32 %s143, 1
          %s1909 = smul.addr %s1908, 32
          %s1910 = scalar_lea.vmem [#allocation10], %s1909
          %1911 = dma.done %s1907, 512
        $region68: #{tpu_custom_call.1} parent=63 // pred_fallthru
          _
      $region64: #{tpu_custom_call.1} parent=5 // pred_fallthru
        _
    $region6: #{tpu_custom_call.1} parent=1 // loop_footer
      %s23 = sadd.s32 1, %s19
    $region7: #{tpu_custom_call.1} parent=1 // loop_footer_branch
      %18 = sbr.rel target = $region3
    $region8: #{tpu_custom_call.1} parent=1 // loop_exit
      _
    %1912 = vsyncpa [#allocation3], 1
    %s1913 = scalar_lea.sflag [#allocation3], 1
    %1914 = vsyncpa %s1913, 1
    %1915 = vsyncpa [#allocation6], 1
    %s1916 = scalar_lea.sflag [#allocation6], 1
    %1917 = vsyncpa %s1916, 1
    %1918 = vsyncpa [#allocation9], 1
    %1919 = vsyncpa [#allocation4], 1
    %s1920 = scalar_lea.sflag [#allocation4], 1
    %1921 = vsyncpa %s1920, 1

</llo_original>
